<compile_context>
chip_gen: v7x
topology: tpu7x:2x2x1
jax: 0.10.0
libtpu: 0.0.40
codegen_flags: <defaults>
</compile_context>

<pallas_src>
import functools

import jax
import jax.numpy as jnp
from jax import lax
from jax.experimental import pallas as pl
from jax.experimental.pallas import tpu as pltpu


def _gcn_disc_kernel(a_ref, w1_ref, w2_ref, wcat_ref, bcat_ref,
                     net_out_ref, head_out_ref, *, n_age):
    # a_ref block: (Bt, N, N) float32; weights are full (untiled) bf16 blocks.
    a = a_ref[...]                                    # (Bt, N, N) f32
    bt, n, _ = a.shape
    h = w1_ref.shape[1]

    # Degrees of (A + I) without ever building the identity: rowsum(A) + 1.
    deg = jnp.sum(a, axis=-1, keepdims=True) + 1.0    # (Bt, N, 1)
    s = lax.rsqrt(jnp.maximum(deg, 1e-12))            # (Bt, N, 1)  D^-1/2 diag

    a_bf = a.astype(jnp.bfloat16)                     # MXU operand
    w1 = w1_ref[...]                                  # (N, H)  bf16
    w2 = w2_ref[...]                                  # (H, H)  bf16

    # ---- Layer 1:  H1 = ReLU(D^-1/2 (A+I) D^-1/2 @ W1)   (X = I)
    #             =  ReLU(s * (A @ (s*W1) + s*W1))
    sw1 = s * w1.astype(jnp.float32)                  # (Bt, N, H) f32
    t1 = lax.dot_general(
        a_bf, sw1.astype(jnp.bfloat16),
        dimension_numbers=(((2,), (1,)), ((0,), (0,))),
        preferred_element_type=jnp.float32)           # (Bt, N, H)
    h1 = jnp.maximum(s * (t1 + sw1), 0.0)             # (Bt, N, H) f32

    # ---- Layer 2:  H2 = D^-1/2 (A+I) D^-1/2 @ (H1 @ W2)
    # Shared-weight matmul flattened to (Bt*N, H) @ (H, H): 128-row MXU op.
    m2 = jnp.dot(h1.reshape(bt * n, h).astype(jnp.bfloat16), w2,
                 preferred_element_type=jnp.float32).reshape(bt, n, h)
    q = s * m2                                        # (Bt, N, H) f32
    t2 = lax.dot_general(
        a_bf, q.astype(jnp.bfloat16),
        dimension_numbers=(((2,), (1,)), ((0,), (0,))),
        preferred_element_type=jnp.float32)           # (Bt, N, H)
    h2 = s * (t2 + q)                                 # (Bt, N, H) f32

    # ---- network head: H2 @ H2^T, contraction on the last dim of both
    # operands (no explicit transpose of h2).
    h2_bf = h2.astype(jnp.bfloat16)
    net = lax.dot_general(
        h2_bf, h2_bf,
        dimension_numbers=(((2,), (2,)), ((0,), (0,))),
        preferred_element_type=jnp.float32)           # (Bt, N, N)
    net_out_ref[...] = net.astype(net_out_ref.dtype)

    # ---- fused age|scanner head on the mean-pooled graph embedding.
    pooled = jnp.mean(h2, axis=1)                     # (Bt, H) f32
    logits = (jnp.dot(pooled.astype(jnp.bfloat16), wcat_ref[...],
                      preferred_element_type=jnp.float32)
              + bcat_ref[...])                        # (Bt, n_age + n_scan)
    col = lax.broadcasted_iota(jnp.int32, logits.shape, 1)
    head = jnp.where(col < n_age, jax.nn.sigmoid(logits), logits)
    head_out_ref[...] = head.astype(head_out_ref.dtype)


@functools.partial(jax.jit, static_argnames=("block_b",))
def discriminator_gcn_fc_sc_forward(A, w1, w2, w_age, b_age, w_scan, b_scan,
                                    *, block_b=8):
    """A: (B, N, N). Returns (network_outs (B,N,N), age_outs (B,n_age),
    scanner_outs (B,n_scan))."""
    B, N, _ = A.shape
    H = w1.shape[1]
    n_age = w_age.shape[1]
    n_scan = w_scan.shape[1]
    n_head = n_age + n_scan

    # Fuse the two tiny heads into one matmul / one output stream.
    w_cat = jnp.concatenate([w_age, w_scan], axis=1).astype(jnp.bfloat16)
    b_cat = jnp.concatenate([b_age, b_scan], axis=1).astype(jnp.float32)
    w1b = w1.astype(jnp.bfloat16)
    w2b = w2.astype(jnp.bfloat16)

    # Fold several samples into each grid step (amortize per-step overhead,
    # feed 128-row matmuls to the MXU).  Pad batch to a multiple of Bt.
    bt = min(block_b, B)
    Bp = ((B + bt - 1) // bt) * bt
    A32 = A.astype(jnp.float32)
    if Bp != B:
        A32 = jnp.pad(A32, ((0, Bp - B), (0, 0), (0, 0)))

    kernel = functools.partial(_gcn_disc_kernel, n_age=n_age)
    full2d = lambda shape: pl.BlockSpec(shape, lambda b: (0, 0))

    out_shapes = (
        jax.ShapeDtypeStruct((Bp, N, N), jnp.float32),
        jax.ShapeDtypeStruct((Bp, n_head), jnp.float32),
    )

    grid_spec = pltpu.PrefetchScalarGridSpec(
        num_scalar_prefetch=0,
        grid=(Bp // bt,),
        in_specs=[
            pl.BlockSpec((bt, N, N), lambda b: (b, 0, 0)),   # A, Bt samples/step
            full2d((N, H)),                                  # W1 (bf16)
            full2d((H, H)),                                  # W2 (bf16)
            full2d((H, n_head)),                             # W_age|W_scan (bf16)
            full2d((1, n_head)),                             # b_age|b_scan
        ],
        out_specs=[
            pl.BlockSpec((bt, N, N), lambda b: (b, 0, 0)),   # network outs
            pl.BlockSpec((bt, n_head), lambda b: (b, 0)),    # fused head outs
        ],
    )

    net, head = pl.pallas_call(
        kernel,
        out_shape=out_shapes,
        grid_spec=grid_spec,
        compiler_params=pltpu.CompilerParams(
            dimension_semantics=("parallel",)),
    )(A32, w1b, w2b, w_cat, b_cat)

    net = net[:B]
    head = head[:B]
    return net, head[:, :n_age], head[:, n_age:]


def init_params(key, lr_dim, hidden, n_age, n_scan):
    """Deterministic glorot-style parameter init (synthetic, no checkpoint)."""
    k1, k2, k3, k4 = jax.random.split(key, 4)

    def glorot(k, shape):
        fan_in, fan_out = shape[0], shape[1]
        scale = jnp.sqrt(6.0 / (fan_in + fan_out))
        return jax.random.uniform(k, shape, jnp.float32, -scale, scale)

    w1 = glorot(k1, (lr_dim, hidden))
    w2 = glorot(k2, (hidden, hidden))
    w_age = glorot(k3, (hidden, n_age))
    b_age = jnp.zeros((1, n_age), jnp.float32)
    w_scan = glorot(k4, (hidden, n_scan))
    b_scan = jnp.zeros((1, n_scan), jnp.float32)
    return w1, w2, w_age, b_age, w_scan, b_scan


if __name__ == "__main__":
    # Small, module-consistent shapes: lr_dim=16, hidden=32, 4 ordinal age
    # bins, 3 scanners.  batch=16 so that Bt=8 gives a grid of length 2
    # (keeps both v7x TensorCores fed) and Bt*N = 128 matmul rows.
    B, LR_DIM, HIDDEN, N_AGE, N_SCAN = 16, 16, 32, 4, 3

    key = jax.random.PRNGKey(0)
    k_a, k_p = jax.random.split(key)

    # Symmetric, non-negative adjacency-like input A (connectome matrix).
    A_raw = jax.random.uniform(k_a, (B, LR_DIM, LR_DIM), jnp.float32)
    A = 0.5 * (A_raw + jnp.transpose(A_raw, (0, 2, 1)))

    params = init_params(k_p, LR_DIM, HIDDEN, N_AGE, N_SCAN)

    network_outs, age_outs, scanner_outs = discriminator_gcn_fc_sc_forward(
        A, *params)
    jax.block_until_ready((network_outs, age_outs, scanner_outs))

    assert network_outs.shape == (B, LR_DIM, LR_DIM)
    assert age_outs.shape == (B, N_AGE)
    assert scanner_outs.shape == (B, N_SCAN)
    assert jnp.all(jnp.isfinite(network_outs))
    assert jnp.all(jnp.isfinite(age_outs))
    assert jnp.all(jnp.isfinite(scanner_outs))
    assert jnp.all(age_outs >= 0.0) and jnp.all(age_outs <= 1.0)

    print("KERNEL_OK")
</pallas_src>

<mosaic_0001>
module attributes {stable_mosaic.version = 11 : i64} {
  func.func @_gcn_disc_kernel(%arg0: i32, %arg1: memref<8x16x16xf32, #tpu.memory_space<vmem>>, %arg2: memref<16x32xbf16, #tpu.memory_space<vmem>>, %arg3: memref<32x32xbf16, #tpu.memory_space<vmem>>, %arg4: memref<32x7xbf16, #tpu.memory_space<vmem>>, %arg5: memref<1x7xf32, #tpu.memory_space<vmem>>, %arg6: memref<8x16x16xf32, #tpu.memory_space<vmem>>, %arg7: memref<8x7xf32, #tpu.memory_space<vmem>>) attributes {dimension_semantics = [#tpu.dimension_semantics<parallel>], iteration_bounds = array<i64: 2>, scalar_prefetch = 0 : i64, scratch_operands = 0 : i64, tpu.core_type = #tpu.core_type<tc>, window_params = [{transform_indices = @transform_0, window_bounds = array<i64: 8, 16, 16>}, {pipeline_mode = #tpu.pipeline_mode<synchronous>, transform_indices = @transform_1, window_bounds = array<i64: 16, 32>}, {pipeline_mode = #tpu.pipeline_mode<synchronous>, transform_indices = @transform_2, window_bounds = array<i64: 32, 32>}, {pipeline_mode = #tpu.pipeline_mode<synchronous>, transform_indices = @transform_3, window_bounds = array<i64: 32, 7>}, {pipeline_mode = #tpu.pipeline_mode<synchronous>, transform_indices = @transform_4, window_bounds = array<i64: 1, 7>}, {transform_indices = @transform_5, window_bounds = array<i64: 8, 16, 16>}, {transform_indices = @transform_6, window_bounds = array<i64: 8, 7>}]} {
    %c0 = arith.constant 0 : index
    %c0_0 = arith.constant 0 : index
    %c0_1 = arith.constant 0 : index
    %0 = vector.load %arg1[%c0, %c0_0, %c0_1] : memref<8x16x16xf32, #tpu.memory_space<vmem>>, vector<8x16x16xf32>
    %cst = arith.constant dense<0.000000e+00> : vector<8x16xf32>
    %1 = vector.multi_reduction <add>, %0, %cst [2] : vector<8x16x16xf32> to vector<8x16xf32>
    %2 = vector.shape_cast %1 : vector<8x16xf32> to vector<8x16x1xf32>
    %cst_2 = arith.constant 1.000000e+00 : f32
    %3 = vector.broadcast %cst_2 : f32 to vector<8x16x1xf32>
    %4 = arith.addf %2, %3 : vector<8x16x1xf32>
    %cst_3 = arith.constant 9.99999996E-13 : f32
    %5 = vector.broadcast %cst_3 : f32 to vector<8x16x1xf32>
    %6 = arith.maximumf %4, %5 : vector<8x16x1xf32>
    %7 = math.rsqrt %6 : vector<8x16x1xf32>
    %8 = arith.truncf %0 : vector<8x16x16xf32> to vector<8x16x16xbf16>
    %c0_4 = arith.constant 0 : index
    %c0_5 = arith.constant 0 : index
    %9 = vector.load %arg2[%c0_4, %c0_5] : memref<16x32xbf16, #tpu.memory_space<vmem>>, vector<16x32xbf16>
    %c0_6 = arith.constant 0 : index
    %c0_7 = arith.constant 0 : index
    %10 = vector.load %arg3[%c0_6, %c0_7] : memref<32x32xbf16, #tpu.memory_space<vmem>>, vector<32x32xbf16>
    %11 = arith.extf %9 : vector<16x32xbf16> to vector<16x32xf32>
    %12 = vector.shape_cast %11 : vector<16x32xf32> to vector<1x16x32xf32>
    %13 = vector.broadcast %7 : vector<8x16x1xf32> to vector<8x16x32xf32>
    %14 = vector.broadcast %12 : vector<1x16x32xf32> to vector<8x16x32xf32>
    %15 = arith.mulf %13, %14 : vector<8x16x32xf32>
    %16 = arith.truncf %15 : vector<8x16x32xf32> to vector<8x16x32xbf16>
    %cst_8 = arith.constant dense<0.000000e+00> : vector<8x16x32xf32>
    %17 = tpu.matmul %8, %16, %cst_8 {dimension_numbers = #tpu.dot_dimension_numbers<[2], [1], [1], [2], [0, 0, 0, 1, 1, 2], [0], [0]>} : vector<8x16x16xbf16>, vector<8x16x32xbf16>, vector<8x16x32xf32> -> vector<8x16x32xf32>
    %18 = arith.addf %17, %15 : vector<8x16x32xf32>
    %19 = vector.broadcast %7 : vector<8x16x1xf32> to vector<8x16x32xf32>
    %20 = arith.mulf %19, %18 : vector<8x16x32xf32>
    %cst_9 = arith.constant 0.000000e+00 : f32
    %21 = vector.broadcast %cst_9 : f32 to vector<8x16x32xf32>
    %22 = arith.maximumf %20, %21 : vector<8x16x32xf32>
    %23 = vector.shape_cast %22 : vector<8x16x32xf32> to vector<128x32xf32>
    %24 = arith.truncf %23 : vector<128x32xf32> to vector<128x32xbf16>
    %cst_10 = arith.constant dense<0.000000e+00> : vector<128x32xf32>
    %25 = tpu.matmul %24, %10, %cst_10 {dimension_numbers = #tpu.dot_dimension_numbers<[1], [0], [0], [1], [0, 0, 1, 1], [], []>} : vector<128x32xbf16>, vector<32x32xbf16>, vector<128x32xf32> -> vector<128x32xf32>
    %26 = vector.shape_cast %25 : vector<128x32xf32> to vector<8x16x32xf32>
    %27 = vector.broadcast %7 : vector<8x16x1xf32> to vector<8x16x32xf32>
    %28 = arith.mulf %27, %26 : vector<8x16x32xf32>
    %29 = arith.truncf %28 : vector<8x16x32xf32> to vector<8x16x32xbf16>
    %cst_11 = arith.constant dense<0.000000e+00> : vector<8x16x32xf32>
    %30 = tpu.matmul %8, %29, %cst_11 {dimension_numbers = #tpu.dot_dimension_numbers<[2], [1], [1], [2], [0, 0, 0, 1, 1, 2], [0], [0]>} : vector<8x16x16xbf16>, vector<8x16x32xbf16>, vector<8x16x32xf32> -> vector<8x16x32xf32>
    %31 = arith.addf %30, %28 : vector<8x16x32xf32>
    %32 = vector.broadcast %7 : vector<8x16x1xf32> to vector<8x16x32xf32>
    %33 = arith.mulf %32, %31 : vector<8x16x32xf32>
    %34 = arith.truncf %33 : vector<8x16x32xf32> to vector<8x16x32xbf16>
    %cst_12 = arith.constant dense<0.000000e+00> : vector<8x16x16xf32>
    %35 = tpu.matmul %34, %34, %cst_12 {dimension_numbers = #tpu.dot_dimension_numbers<[2], [2], [1], [1], [0, 0, 0, 1, 1, 1], [0], [0]>} : vector<8x16x32xbf16>, vector<8x16x32xbf16>, vector<8x16x16xf32> -> vector<8x16x16xf32>
    %c0_13 = arith.constant 0 : index
    %c0_14 = arith.constant 0 : index
    %c0_15 = arith.constant 0 : index
    %36 = vector.load %arg6[%c0_13, %c0_14, %c0_15] : memref<8x16x16xf32, #tpu.memory_space<vmem>>, vector<8x16x16xf32>
    tpu.vector_store %arg6[%c0_13, %c0_14, %c0_15], %35 {strides = array<i32>} : memref<8x16x16xf32, #tpu.memory_space<vmem>>, vector<8x16x16xf32>,
    %cst_16 = arith.constant dense<0.000000e+00> : vector<8x32xf32>
    %37 = vector.multi_reduction <add>, %33, %cst_16 [1] : vector<8x16x32xf32> to vector<8x32xf32>
    %cst_17 = arith.constant 1.600000e+01 : f32
    %38 = vector.broadcast %cst_17 : f32 to vector<8x32xf32>
    %39 = arith.divf %37, %38 : vector<8x32xf32>
    %40 = arith.truncf %39 : vector<8x32xf32> to vector<8x32xbf16>
    %c0_18 = arith.constant 0 : index
    %c0_19 = arith.constant 0 : index
    %41 = vector.load %arg4[%c0_18, %c0_19] : memref<32x7xbf16, #tpu.memory_space<vmem>>, vector<32x7xbf16>
    %cst_20 = arith.constant dense<0.000000e+00> : vector<8x7xf32>
    %42 = tpu.matmul %40, %41, %cst_20 {dimension_numbers = #tpu.dot_dimension_numbers<[1], [0], [0], [1], [0, 0, 1, 1], [], []>} : vector<8x32xbf16>, vector<32x7xbf16>, vector<8x7xf32> -> vector<8x7xf32>
    %c0_21 = arith.constant 0 : index
    %c0_22 = arith.constant 0 : index
    %43 = vector.load %arg5[%c0_21, %c0_22] : memref<1x7xf32, #tpu.memory_space<vmem>>, vector<1x7xf32>
    %44 = vector.broadcast %43 : vector<1x7xf32> to vector<8x7xf32>
    %45 = arith.addf %42, %44 : vector<8x7xf32>
    %46 = tpu.iota {dimensions = array<i32: 1>} : vector<8x7xi32>
    %c4_i32 = arith.constant 4 : i32
    %47 = vector.broadcast %c4_i32 : i32 to vector<8x7xi32>
    %48 = arith.cmpi slt, %46, %47 : vector<8x7xi32>
    %49 = arith.negf %45 : vector<8x7xf32>
    %50 = math.exp %49 : vector<8x7xf32>
    %cst_23 = arith.constant 1.000000e+00 : f32
    %51 = vector.broadcast %cst_23 : f32 to vector<8x7xf32>
    %52 = arith.addf %51, %50 : vector<8x7xf32>
    %53 = arith.divf %51, %52 : vector<8x7xf32>
    %54 = arith.select %48, %53, %45 : vector<8x7xi1>, vector<8x7xf32>
    %c0_24 = arith.constant 0 : index
    %c0_25 = arith.constant 0 : index
    %55 = vector.load %arg7[%c0_24, %c0_25] : memref<8x7xf32, #tpu.memory_space<vmem>>, vector<8x7xf32>
    tpu.vector_store %arg7[%c0_24, %c0_25], %54 {strides = array<i32>} : memref<8x7xf32, #tpu.memory_space<vmem>>, vector<8x7xf32>,
    return
  }
  func.func @transform_0(%arg0: i32) -> (i32, i32, i32) {
    %c0_i32 = arith.constant 0 : i32
    %c0_i32_0 = arith.constant 0 : i32
    %c0_i32_1 = arith.constant 0 : i32
    return %arg0, %c0_i32, %c0_i32_0 : i32, i32, i32
  }
  func.func @transform_1(%arg0: i32) -> (i32, i32) {
    %c0_i32 = arith.constant 0 : i32
    %c0_i32_0 = arith.constant 0 : i32
    %c0_i32_1 = arith.constant 0 : i32
    return %c0_i32, %c0_i32_0 : i32, i32
  }
  func.func @transform_2(%arg0: i32) -> (i32, i32) {
    %c0_i32 = arith.constant 0 : i32
    %c0_i32_0 = arith.constant 0 : i32
    %c0_i32_1 = arith.constant 0 : i32
    return %c0_i32, %c0_i32_0 : i32, i32
  }
  func.func @transform_3(%arg0: i32) -> (i32, i32) {
    %c0_i32 = arith.constant 0 : i32
    %c0_i32_0 = arith.constant 0 : i32
    %c0_i32_1 = arith.constant 0 : i32
    return %c0_i32, %c0_i32_0 : i32, i32
  }
  func.func @transform_4(%arg0: i32) -> (i32, i32) {
    %c0_i32 = arith.constant 0 : i32
    %c0_i32_0 = arith.constant 0 : i32
    %c0_i32_1 = arith.constant 0 : i32
    return %c0_i32, %c0_i32_0 : i32, i32
  }
  func.func @transform_5(%arg0: i32) -> (i32, i32, i32) {
    %c0_i32 = arith.constant 0 : i32
    %c0_i32_0 = arith.constant 0 : i32
    %c0_i32_1 = arith.constant 0 : i32
    return %arg0, %c0_i32, %c0_i32_0 : i32, i32, i32
  }
  func.func @transform_6(%arg0: i32) -> (i32, i32) {
    %c0_i32 = arith.constant 0 : i32
    %c0_i32_0 = arith.constant 0 : i32
    return %arg0, %c0_i32 : i32, i32
  }
}

</mosaic_0001>

<llo_original>
// kernel: discriminator_gcn_fc_sc_forward.1
$region0: #{discriminator_gcn_fc_sc_forward.1}
  #allocation0 [shape = 'u32[]', space=smem, size = 0x4, offset = 0x4, fixed_abs, tag = 'smem constant byte address 0x4 - core index']
  #allocation1 [shape = 'u32[144,128]{1,0:T(1,128)}', space=vmem, size = 0x12000, scoped, tag = 'internal scratch']
  %s0 = inlined_call_operand.hbm [shape: f32[16,16,16], index: 0, kind: input, shape index: {}]
  %s1 = inlined_call_operand.vmem [shape: bf16[16,32], index: 1, kind: input, shape index: {}]
  %s2 = inlined_call_operand.vmem [shape: bf16[32,32], index: 2, kind: input, shape index: {}]
  %s3 = inlined_call_operand.vmem [shape: bf16[32,7], index: 3, kind: input, shape index: {}]
  %s4 = inlined_call_operand.vmem [shape: f32[1,7], index: 4, kind: input, shape index: {}]
  %s5 = inlined_call_operand.hbm [shape: f32[16,16,16], index: 5, kind: output, shape index: {0}]
  %s6 = inlined_call_operand.vmem [shape: f32[16,7], index: 6, kind: output, shape index: {1}]
  %7 = xla_tuple %s5, %s6
  %s8 = sld [smem:[#allocation0]]
  $region65: #{discriminator_gcn_fc_sc_forward.1} parent=0
    _
  %s10 = ssub.s32 1, %s8
  %s11 = scalar_select 0, %s10, %s8
  $region1: #{discriminator_gcn_fc_sc_forward.1} parent=0
    #allocation2 [shape = 'u8[131072]{0}', space=vmem, size = 0x20000, scoped, tag = 'input window, operand 0']
    #allocation3 [shape = 's32[2]{0}', space=sflag, size = 0x8, scoped, tag = 'scoped memory for discriminator_gcn_fc_sc_forward.1']
    #allocation4 [shape = 's32[2]{0}', space=sflag, size = 0x8, scoped, tag = 'scoped memory for discriminator_gcn_fc_sc_forward.1']
    #allocation5 [shape = 'u8[131072]{0}', space=vmem, size = 0x20000, scoped, tag = 'output window, operand 0']
    %12 = vsyncpa [#allocation3], 0
    %s13 = scalar_lea.sflag [#allocation3], 1
    %14 = vsyncpa %s13, 0
    %15 = vsyncpa [#allocation4], 0
    %s16 = scalar_lea.sflag [#allocation4], 1
    %17 = vsyncpa %s16, 0
    loop: start=0, step=1, limit=4
    $region2: #{discriminator_gcn_fc_sc_forward.1} parent=1 // loop_pre_header
      _
    $region3: #{discriminator_gcn_fc_sc_forward.1} parent=1 // loop_header
      %s19 = sphi 0, %s23
      %p20 = scmp.ge.s32.totalorder %s19, 4
      %s29 = sphi 0, %s31
      %s32 = sphi 0, %s29
      %s33 = sphi 0, %s32
      %s49 = sphi 0, %s33
      %s53 = sphi 0, %s53
      %s55 = sphi 0, %s53
      %s56 = sphi 0, %s55
      %s70 = sphi 0, %s56
      %s74 = sphi 0, %s74
      %s76 = sphi 0, %s74
      %s77 = sphi 0, %s76
      %s91 = sphi 0, %s77
      %s95 = sphi 0, %s95
      %s97 = sphi 0, %s95
      %s98 = sphi 0, %s97
      %s112 = sphi 0, %s98
      %s116 = sphi 0, %s116
      %s118 = sphi 0, %s116
      %s119 = sphi 0, %s118
      %s133 = sphi 0, %s119
      %s139 = sphi 0, %s141
      %s142 = sphi 0, %s139
      %s143 = sphi 0, %s142
      %s159 = sphi 0, %s143
      %s165 = sphi 0, %s167
      %s168 = sphi 0, %s165
      %s169 = sphi 0, %s168
      %s185 = sphi 0, %s169
    $region4: #{discriminator_gcn_fc_sc_forward.1} parent=1 // loop_header_branch
      %22 = sbr.rel (%p20) target = $region8
    $region5: #{discriminator_gcn_fc_sc_forward.1} parent=1 // loop_body
      %s24 = ssub.s32 %s19, 1
      %s25 = ssub.s32 %s19, 2
      %s26 = sadd.s32 %s19, 1
      %s27 = ssub.s32 %s19, %s26
      %p28 = scmp.eq.s32.totalorder %s27, 0
      %s30 = sadd.s32 %s29, 1
      %s31 = scalar_select %p28, %s29, %s30
      %p34 = pneg %p28
      %p35 = scmp.eq.s32.totalorder %s19, 1
      %p36 = por %p34, %p35
      %p37 = scmp.ne.s32.totalorder %s29, %s32
      %p38 = scmp.eq.s32.totalorder %s19, 0
      %p39 = por %p37, %p38
      %p40 = scmp.ne.s32.totalorder %s29, %s32
      %p41 = scmp.eq.s32.totalorder %s24, 1
      %p42 = por %p40, %p41
      %p43 = scmp.ne.s32.totalorder %s32, %s33
      %p44 = scmp.eq.s32.totalorder %s24, 0
      %p45 = por %p43, %p44
      %p46 = scmp.ne.s32.totalorder %s32, %s33
      %p47 = scmp.eq.s32.totalorder %s25, 1
      %p48 = por %p46, %p47
      %p50 = scmp.ne.s32.totalorder %s33, %s49
      %p51 = scmp.eq.s32.totalorder %s25, 0
      %p52 = por %p50, %p51
      %s54 = sadd.s32 %s53, 1
      %p57 = scmp.eq.s32.totalorder %s19, 1
      %p58 = scmp.ne.s32.totalorder %s53, %s55
      %p59 = scmp.eq.s32.totalorder %s19, 0
      %p60 = por %p58, %p59
      %p61 = scmp.ne.s32.totalorder %s53, %s55
      %p62 = scmp.eq.s32.totalorder %s24, 1
      %p63 = por %p61, %p62
      %p64 = scmp.ne.s32.totalorder %s55, %s56
      %p65 = scmp.eq.s32.totalorder %s24, 0
      %p66 = por %p64, %p65
      %p67 = scmp.ne.s32.totalorder %s55, %s56
      %p68 = scmp.eq.s32.totalorder %s25, 1
      %p69 = por %p67, %p68
      %p71 = scmp.ne.s32.totalorder %s56, %s70
      %p72 = scmp.eq.s32.totalorder %s25, 0
      %p73 = por %p71, %p72
      %s75 = sadd.s32 %s74, 1
      %p78 = scmp.eq.s32.totalorder %s19, 1
      %p79 = scmp.ne.s32.totalorder %s74, %s76
      %p80 = scmp.eq.s32.totalorder %s19, 0
      %p81 = por %p79, %p80
      %p82 = scmp.ne.s32.totalorder %s74, %s76
      %p83 = scmp.eq.s32.totalorder %s24, 1
      %p84 = por %p82, %p83
      %p85 = scmp.ne.s32.totalorder %s76, %s77
      %p86 = scmp.eq.s32.totalorder %s24, 0
      %p87 = por %p85, %p86
      %p88 = scmp.ne.s32.totalorder %s76, %s77
      %p89 = scmp.eq.s32.totalorder %s25, 1
      %p90 = por %p88, %p89
      %p92 = scmp.ne.s32.totalorder %s77, %s91
      %p93 = scmp.eq.s32.totalorder %s25, 0
      %p94 = por %p92, %p93
      %s96 = sadd.s32 %s95, 1
      %p99 = scmp.eq.s32.totalorder %s19, 1
      %p100 = scmp.ne.s32.totalorder %s95, %s97
      %p101 = scmp.eq.s32.totalorder %s19, 0
      %p102 = por %p100, %p101
      %p103 = scmp.ne.s32.totalorder %s95, %s97
      %p104 = scmp.eq.s32.totalorder %s24, 1
      %p105 = por %p103, %p104
      %p106 = scmp.ne.s32.totalorder %s97, %s98
      %p107 = scmp.eq.s32.totalorder %s24, 0
      %p108 = por %p106, %p107
      %p109 = scmp.ne.s32.totalorder %s97, %s98
      %p110 = scmp.eq.s32.totalorder %s25, 1
      %p111 = por %p109, %p110
      %p113 = scmp.ne.s32.totalorder %s98, %s112
      %p114 = scmp.eq.s32.totalorder %s25, 0
      %p115 = por %p113, %p114
      %s117 = sadd.s32 %s116, 1
      %p120 = scmp.eq.s32.totalorder %s19, 1
      %p121 = scmp.ne.s32.totalorder %s116, %s118
      %p122 = scmp.eq.s32.totalorder %s19, 0
      %p123 = por %p121, %p122
      %p124 = scmp.ne.s32.totalorder %s116, %s118
      %p125 = scmp.eq.s32.totalorder %s24, 1
      %p126 = por %p124, %p125
      %p127 = scmp.ne.s32.totalorder %s118, %s119
      %p128 = scmp.eq.s32.totalorder %s24, 0
      %p129 = por %p127, %p128
      %p130 = scmp.ne.s32.totalorder %s118, %s119
      %p131 = scmp.eq.s32.totalorder %s25, 1
      %p132 = por %p130, %p131
      %p134 = scmp.ne.s32.totalorder %s119, %s133
      %p135 = scmp.eq.s32.totalorder %s25, 0
      %p136 = por %p134, %p135
      %s137 = ssub.s32 %s19, %s26
      %p138 = scmp.eq.s32.totalorder %s137, 0
      %s140 = sadd.s32 %s139, 1
      %s141 = scalar_select %p138, %s139, %s140
      %p144 = pneg %p138
      %p145 = scmp.eq.s32.totalorder %s19, 1
      %p146 = por %p144, %p145
      %p147 = scmp.ne.s32.totalorder %s139, %s142
      %p148 = scmp.eq.s32.totalorder %s19, 0
      %p149 = por %p147, %p148
      %p150 = scmp.ne.s32.totalorder %s139, %s142
      %p151 = scmp.eq.s32.totalorder %s24, 1
      %p152 = por %p150, %p151
      %p153 = scmp.ne.s32.totalorder %s142, %s143
      %p154 = scmp.eq.s32.totalorder %s24, 0
      %p155 = por %p153, %p154
      %p156 = scmp.ne.s32.totalorder %s142, %s143
      %p157 = scmp.eq.s32.totalorder %s25, 1
      %p158 = por %p156, %p157
      %p160 = scmp.ne.s32.totalorder %s143, %s159
      %p161 = scmp.eq.s32.totalorder %s25, 0
      %p162 = por %p160, %p161
      %s163 = ssub.s32 %s19, %s26
      %p164 = scmp.eq.s32.totalorder %s163, 0
      %s166 = sadd.s32 %s165, 1
      %s167 = scalar_select %p164, %s165, %s166
      %p170 = pneg %p164
      %p171 = scmp.eq.s32.totalorder %s19, 1
      %p172 = por %p170, %p171
      %p173 = scmp.ne.s32.totalorder %s165, %s168
      %p174 = scmp.eq.s32.totalorder %s19, 0
      %p175 = por %p173, %p174
      %p176 = scmp.ne.s32.totalorder %s165, %s168
      %p177 = scmp.eq.s32.totalorder %s24, 1
      %p178 = por %p176, %p177
      %p179 = scmp.ne.s32.totalorder %s168, %s169
      %p180 = scmp.eq.s32.totalorder %s24, 0
      %p181 = por %p179, %p180
      %p182 = scmp.ne.s32.totalorder %s168, %s169
      %p183 = scmp.eq.s32.totalorder %s25, 1
      %p184 = por %p182, %p183
      %p186 = scmp.ne.s32.totalorder %s169, %s185
      %p187 = scmp.eq.s32.totalorder %s25, 0
      %p188 = por %p186, %p187
      %p189 = scmp.le.s32.totalorder 1, %s19
      %p190 = scmp.lt.s32.totalorder %s19, 3
      %p191 = pnand %p189, %p190
      %p192 = pneg %p191
      // Predicated region
      $region9: #{discriminator_gcn_fc_sc_forward.1} parent=5 // pred_check
        _
      $region10: #{discriminator_gcn_fc_sc_forward.1} parent=5 // pred_check_branch
        %194 = sbr.rel (%p191) target = $region12
      $region11: #{discriminator_gcn_fc_sc_forward.1} parent=5 // pred_region
        %s195 = ssub.s32 %s19, 1
        // Predicated region
        $region13: #{discriminator_gcn_fc_sc_forward.1} parent=11 // pred_check
          %p196 = pneg %p66
        $region14: #{discriminator_gcn_fc_sc_forward.1} parent=11 // pred_check_branch
          %198 = sbr.rel (%p196) target = $region16
        $region15: #{discriminator_gcn_fc_sc_forward.1} parent=11 // pred_region
          _
        $region16: #{discriminator_gcn_fc_sc_forward.1} parent=11 // pred_fallthru
          _
        // Predicated region
        $region17: #{discriminator_gcn_fc_sc_forward.1} parent=11 // pred_check
          %p199 = pneg %p87
        $region18: #{discriminator_gcn_fc_sc_forward.1} parent=11 // pred_check_branch
          %201 = sbr.rel (%p199) target = $region20
        $region19: #{discriminator_gcn_fc_sc_forward.1} parent=11 // pred_region
          _
        $region20: #{discriminator_gcn_fc_sc_forward.1} parent=11 // pred_fallthru
          _
        // Predicated region
        $region21: #{discriminator_gcn_fc_sc_forward.1} parent=11 // pred_check
          %p202 = pneg %p108
        $region22: #{discriminator_gcn_fc_sc_forward.1} parent=11 // pred_check_branch
          %204 = sbr.rel (%p202) target = $region24
        $region23: #{discriminator_gcn_fc_sc_forward.1} parent=11 // pred_region
          _
        $region24: #{discriminator_gcn_fc_sc_forward.1} parent=11 // pred_fallthru
          _
        // Predicated region
        $region25: #{discriminator_gcn_fc_sc_forward.1} parent=11 // pred_check
          %p205 = pneg %p129
        $region26: #{discriminator_gcn_fc_sc_forward.1} parent=11 // pred_check_branch
          %207 = sbr.rel (%p205) target = $region28
        $region27: #{discriminator_gcn_fc_sc_forward.1} parent=11 // pred_region
          _
        $region28: #{discriminator_gcn_fc_sc_forward.1} parent=11 // pred_fallthru
          _
      $region12: #{discriminator_gcn_fc_sc_forward.1} parent=5 // pred_fallthru
        _
      %p208 = scmp.lt.s32.totalorder %s19, 2
      // Predicated region
      $region29: #{discriminator_gcn_fc_sc_forward.1} parent=5 // pred_check
        %p209 = pneg %p208
      $region30: #{discriminator_gcn_fc_sc_forward.1} parent=5 // pred_check_branch
        %211 = sbr.rel (%p209) target = $region32
      $region31: #{discriminator_gcn_fc_sc_forward.1} parent=5 // pred_region
        // Predicated region
        $region33: #{discriminator_gcn_fc_sc_forward.1} parent=31 // pred_check
          %p212 = pneg %p39
        $region34: #{discriminator_gcn_fc_sc_forward.1} parent=31 // pred_check_branch
          %214 = sbr.rel (%p212) target = $region36
        $region35: #{discriminator_gcn_fc_sc_forward.1} parent=31 // pred_region
          %s215 = sand.u32 %s29, 1
          %s216 = scalar_lea.sflag [#allocation3], %s215
          %s217 = sand.u32 %s29, 1
          %s218 = smul.addr %s217, 128
          %s219 = scalar_lea.vmem [#allocation2], %s218
          %s220 = smul.u32 8, %s19
          %s222 = ssub.s32 2048, 2048
          %223 = vsyncadd %s216, %s222
          %s224 = smul.addr %s220, 2
          %s225 = smul.addr %s224, 128
          %s226 = scalar_lea.hbm %s0, %s225
          %s227 = sshll.u32 %s219, 4
          %s228 = int_to_ptr.vmem [resolvable:$true] %s227
          %233 = dma.hbm_to_vmem [thread:$0]  %s226, 2048, %s228, %s216, 128, 128, 8
        $region36: #{discriminator_gcn_fc_sc_forward.1} parent=31 // pred_fallthru
          _
      $region32: #{discriminator_gcn_fc_sc_forward.1} parent=5 // pred_fallthru
        _
      %p234 = scmp.le.s32.totalorder 1, %s19
      %p235 = scmp.lt.s32.totalorder %s19, 3
      %p236 = pnand %p234, %p235
      %p237 = pneg %p236
      // Predicated region
      $region37: #{discriminator_gcn_fc_sc_forward.1} parent=5 // pred_check
        _
      $region38: #{discriminator_gcn_fc_sc_forward.1} parent=5 // pred_check_branch
        %239 = sbr.rel (%p236) target = $region40
      $region39: #{discriminator_gcn_fc_sc_forward.1} parent=5 // pred_region
        %s240 = ssub.s32 %s19, 1
        %s241 = sand.u32 %s32, 1
        %s242 = scalar_lea.sflag [#allocation3], %s241
        %s243 = sand.u32 %s32, 1
        %s244 = smul.addr %s243, 128
        %s245 = scalar_lea.vmem [#allocation2], %s244
        // Predicated region
        $region41: #{discriminator_gcn_fc_sc_forward.1} parent=39 // pred_check
          %p246 = pneg %p45
        $region42: #{discriminator_gcn_fc_sc_forward.1} parent=39 // pred_check_branch
          %248 = sbr.rel (%p246) target = $region44
        $region43: #{discriminator_gcn_fc_sc_forward.1} parent=39 // pred_region
          %249 = dma.done %s242, 2048
        $region44: #{discriminator_gcn_fc_sc_forward.1} parent=39 // pred_fallthru
          _
        %s250 = sand.u32 %s32, 1
        %s251 = scalar_lea.sflag [#allocation3], %s250
        %s252 = sand.u32 %s32, 1
        %s253 = smul.addr %s252, 128
        %s254 = scalar_lea.vmem [#allocation2], %s253
        %p255 = pneg %p45
        %p256 = pneg %p42
        %p257 = pneg %p66
        %p258 = pneg %p63
        %p259 = pneg %p87
        %p260 = pneg %p84
        %p261 = pneg %p108
        %p262 = pneg %p105
        %p263 = pneg %p129
        %p264 = pneg %p126
        %p265 = pneg %p155
        %p266 = pneg %p152
        %s267 = sand.u32 %s142, 1
        %s268 = scalar_lea.sflag [#allocation4], %s267
        %s269 = sand.u32 %s142, 1
        %s270 = smul.addr %s269, 128
        %s271 = scalar_lea.vmem [#allocation5], %s270
        %p272 = pneg %p181
        %p273 = pneg %p178
        %p274 = scmp.lt.s32.totalorder %s24, 1
        %s275 = scalar_select %p274, %s24, 1
        %s276 = smul.addr %s275, 8
        %s277 = scalar_lea.vmem %s6, %s276
        %s278 = smul.u32 8, %s24
        %s279 = smul.u32 8, %s24
        %p280 = scmp.lt.s32.totalorder %s24, 1
        %s281 = scalar_select %p280, %s24, 1
        %s282 = smul.addr %s281, 8
        %s283 = scalar_lea.vmem %s6, %s282
        %v285 = vld [vmem:[%s245] sm:$0xff]
        %v286 = vld [vmem:[%s245 + $0x8] sm:$0xff]
        %v287 = vld [vmem:[%s245 + $0x10] sm:$0xff]
        %v288 = vld [vmem:[%s245 + $0x18] sm:$0xff]
        %v289 = vld [vmem:[%s245 + $0x20] sm:$0xff]
        %v290 = vld [vmem:[%s245 + $0x28] sm:$0xff]
        %v291 = vld [vmem:[%s245 + $0x30] sm:$0xff]
        %v292 = vld [vmem:[%s245 + $0x38] sm:$0xff]
        %v293 = vld [vmem:[%s245 + $0x40] sm:$0xff]
        %v294 = vld [vmem:[%s245 + $0x48] sm:$0xff]
        %v295 = vld [vmem:[%s245 + $0x50] sm:$0xff]
        %v296 = vld [vmem:[%s245 + $0x58] sm:$0xff]
        %v297 = vld [vmem:[%s245 + $0x60] sm:$0xff]
        %v298 = vld [vmem:[%s245 + $0x68] sm:$0xff]
        %v299 = vld [vmem:[%s245 + $0x70] sm:$0xff]
        %v300 = vld [vmem:[%s245 + $0x78] sm:$0xff]
        %vm301 = vcmask 130048
        %v302 = vsel %vm301, %v285, 0.0
        %303 = vadd.xlane.f32.xlu0 %v302
        %v304 = vpop.xlane.xlu0 %303
        %v305 = vsel %vm301, %v286, 0.0
        %306 = vadd.xlane.f32.xlu0 %v305
        %v307 = vpop.xlane.xlu0 %306
        %v308 = vsel %vm301, %v287, 0.0
        %309 = vadd.xlane.f32.xlu0 %v308
        %v310 = vpop.xlane.xlu0 %309
        %v311 = vsel %vm301, %v288, 0.0
        %312 = vadd.xlane.f32.xlu0 %v311
        %v313 = vpop.xlane.xlu0 %312
        %v314 = vsel %vm301, %v289, 0.0
        %315 = vadd.xlane.f32.xlu0 %v314
        %v316 = vpop.xlane.xlu0 %315
        %v317 = vsel %vm301, %v290, 0.0
        %318 = vadd.xlane.f32.xlu0 %v317
        %v319 = vpop.xlane.xlu0 %318
        %v320 = vsel %vm301, %v291, 0.0
        %321 = vadd.xlane.f32.xlu0 %v320
        %v322 = vpop.xlane.xlu0 %321
        %v323 = vsel %vm301, %v292, 0.0
        %324 = vadd.xlane.f32.xlu0 %v323
        %v325 = vpop.xlane.xlu0 %324
        %v326 = vsel %vm301, %v293, 0.0
        %327 = vadd.xlane.f32.xlu0 %v326
        %v328 = vpop.xlane.xlu0 %327
        %v329 = vsel %vm301, %v294, 0.0
        %330 = vadd.xlane.f32.xlu0 %v329
        %v331 = vpop.xlane.xlu0 %330
        %v332 = vsel %vm301, %v295, 0.0
        %333 = vadd.xlane.f32.xlu0 %v332
        %v334 = vpop.xlane.xlu0 %333
        %v335 = vsel %vm301, %v296, 0.0
        %336 = vadd.xlane.f32.xlu0 %v335
        %v337 = vpop.xlane.xlu0 %336
        %v338 = vsel %vm301, %v297, 0.0
        %339 = vadd.xlane.f32.xlu0 %v338
        %v340 = vpop.xlane.xlu0 %339
        %v341 = vsel %vm301, %v298, 0.0
        %342 = vadd.xlane.f32.xlu0 %v341
        %v343 = vpop.xlane.xlu0 %342
        %v344 = vsel %vm301, %v299, 0.0
        %345 = vadd.xlane.f32.xlu0 %v344
        %v346 = vpop.xlane.xlu0 %345
        %v347 = vsel %vm301, %v300, 0.0
        %348 = vadd.xlane.f32.xlu0 %v347
        %v349 = vpop.xlane.xlu0 %348
        %v350 = vadd.f32 %v304, 1.0
        %v351 = vadd.f32 %v307, 1.0
        %v352 = vadd.f32 %v310, 1.0
        %v353 = vadd.f32 %v313, 1.0
        %v354 = vadd.f32 %v316, 1.0
        %v355 = vadd.f32 %v319, 1.0
        %v356 = vadd.f32 %v322, 1.0
        %v357 = vadd.f32 %v325, 1.0
        %v358 = vadd.f32 %v328, 1.0
        %v359 = vadd.f32 %v331, 1.0
        %v360 = vadd.f32 %v334, 1.0
        %v361 = vadd.f32 %v337, 1.0
        %v362 = vadd.f32 %v340, 1.0
        %v363 = vadd.f32 %v343, 1.0
        %v364 = vadd.f32 %v346, 1.0
        %v365 = vadd.f32 %v349, 1.0
        %v366 = vmax.f32 %v350, 1e-12
        %v367 = vmax.f32 %v351, 1e-12
        %v368 = vmax.f32 %v352, 1e-12
        %v369 = vmax.f32 %v353, 1e-12
        %v370 = vmax.f32 %v354, 1e-12
        %v371 = vmax.f32 %v355, 1e-12
        %v372 = vmax.f32 %v356, 1e-12
        %v373 = vmax.f32 %v357, 1e-12
        %v374 = vmax.f32 %v358, 1e-12
        %v375 = vmax.f32 %v359, 1e-12
        %v376 = vmax.f32 %v360, 1e-12
        %v377 = vmax.f32 %v361, 1e-12
        %v378 = vmax.f32 %v362, 1e-12
        %v379 = vmax.f32 %v363, 1e-12
        %v380 = vmax.f32 %v364, 1e-12
        %v381 = vmax.f32 %v365, 1e-12
        %v382 = vrsqrt.pop %v366
        %v383 = vrsqrt.pop %v367
        %v384 = vrsqrt.pop %v368
        %v385 = vrsqrt.pop %v369
        %v386 = vrsqrt.pop %v370
        %v387 = vrsqrt.pop %v371
        %v388 = vrsqrt.pop %v372
        %v389 = vrsqrt.pop %v373
        %v390 = vrsqrt.pop %v374
        %v391 = vrsqrt.pop %v375
        %v392 = vrsqrt.pop %v376
        %v393 = vrsqrt.pop %v377
        %v394 = vrsqrt.pop %v378
        %v395 = vrsqrt.pop %v379
        %v396 = vrsqrt.pop %v380
        %v397 = vrsqrt.pop %v381
        %v398 = vpack.c.bf16 %v286, %v285
        %v399 = vpack.c.bf16 %v288, %v287
        %v400 = vpack.c.bf16 %v290, %v289
        %v401 = vpack.c.bf16 %v292, %v291
        %v402 = vpack.c.bf16 %v294, %v293
        %v403 = vpack.c.bf16 %v296, %v295
        %v404 = vpack.c.bf16 %v298, %v297
        %v405 = vpack.c.bf16 %v300, %v299
        %v406 = vld [vmem:[%s1] sm:$0xf]
        %v407 = vld [vmem:[%s1 + $0x4] sm:$0xf]
        %v408 = vld [vmem:[%s2] sm:$0xf]
        %v409 = vld [vmem:[%s2 + $0x4] sm:$0xf]
        %v410 = vld [vmem:[%s2 + $0x8] sm:$0xf]
        %v411 = vld [vmem:[%s2 + $0xc] sm:$0xf]
        %v412 = vunpack.c.l.bf16 %v406
        %v413 = vunpack.c.l.bf16 %v407
        %v414 = vmul.f32 %v382, %v412
        %v415 = vmul.f32 %v383, %v413
        %v416 = vmul.f32 %v384, %v412
        %v417 = vmul.f32 %v385, %v413
        %v418 = vmul.f32 %v386, %v412
        %v419 = vmul.f32 %v387, %v413
        %v420 = vmul.f32 %v388, %v412
        %v421 = vmul.f32 %v389, %v413
        %v422 = vmul.f32 %v390, %v412
        %v423 = vmul.f32 %v391, %v413
        %v424 = vmul.f32 %v392, %v412
        %v425 = vmul.f32 %v393, %v413
        %v426 = vmul.f32 %v394, %v412
        %v427 = vmul.f32 %v395, %v413
        %v428 = vmul.f32 %v396, %v412
        %v429 = vmul.f32 %v397, %v413
        %v430 = vpack.c.bf16 %v415, %v414
        %v431 = vpack.c.bf16 %v417, %v416
        %v432 = vpack.c.bf16 %v419, %v418
        %v433 = vpack.c.bf16 %v421, %v420
        %v434 = vpack.c.bf16 %v423, %v422
        %v435 = vpack.c.bf16 %v425, %v424
        %v436 = vpack.c.bf16 %v427, %v426
        %v437 = vpack.c.bf16 %v429, %v428
        %v439 = vsel %vm301, %v398, 0
        %441 = vmatprep.subr.bf16.mxu0 0
        %442 = vmatpush1.bf16.msra.mxu0 %v430
        %443 = vmatprep.subr.bf16.mxu0 0
        %444 = vmatpush1.bf16.msra.mxu0 0
        %445 = vmatprep.subr.bf16.mxu0 0
        %446 = vmatpush1.bf16.msra.mxu0 0
        %447 = vmatprep.subr.bf16.mxu0 0
        %448 = vmatpush1.bf16.msra.mxu0 0
        %449 = vmatprep.subr.bf16.mxu0 0
        %450 = vmatpush1.bf16.msra.mxu0 0
        %451 = vmatprep.subr.bf16.mxu0 0
        %452 = vmatpush1.bf16.msra.mxu0 0
        %453 = vmatprep.subr.bf16.mxu0 0
        %454 = vmatpush1.bf16.msra.mxu0 0
        %455 = vmatprep.subr.bf16.mxu0 0
        %456 = vmatpush1.bf16.msra.mxu0 0
        %457 = vmatprep.subr.bf16.mxu0 0
        %458 = vmatpush1.bf16.msra.mxu0 0
        %459 = vmatprep.subr.bf16.mxu0 0
        %460 = vmatpush1.bf16.msra.mxu0 0
        %461 = vmatprep.subr.bf16.mxu0 0
        %462 = vmatpush1.bf16.msra.mxu0 0
        %463 = vmatprep.subr.bf16.mxu0 0
        %464 = vmatpush1.bf16.msra.mxu0 0
        %465 = vmatprep.subr.bf16.mxu0 0
        %466 = vmatpush1.bf16.msra.mxu0 0
        %467 = vmatprep.subr.bf16.mxu0 0
        %468 = vmatpush1.bf16.msra.mxu0 0
        %469 = vmatprep.subr.bf16.mxu0 0
        %470 = vmatpush1.bf16.msra.mxu0 0
        %471 = vmatprep.subr.bf16.mxu0 0
        %472 = vmatpush1.bf16.msra.mxu0 0
        %473 = vmatprep.mubr.bf16.mxu0 0
        %474 = vmatmul.mubr.bf16.gmra.mrb[0].mxu0 %v439
        %v475 = vpop.f32.mrb[0].mxu0
        %v476 = vadd.f32 %v414, %v475
        %v477 = vpop.f32.mrb[0].mxu0
        %v478 = vpop.f32.mrb[0].mxu0
        %v479 = vadd.f32 %v415, %v478
        %v480 = vpop.f32.mrb[0].mxu0
        %481 = vdwg.mxu0
        %v483 = vsel %vm301, %v399, 0
        %485 = vmatprep.subr.bf16.mxu0 0
        %486 = vmatpush1.bf16.msra.mxu0 %v431
        %487 = vmatprep.subr.bf16.mxu0 0
        %488 = vmatpush1.bf16.msra.mxu0 0
        %489 = vmatprep.subr.bf16.mxu0 0
        %490 = vmatpush1.bf16.msra.mxu0 0
        %491 = vmatprep.subr.bf16.mxu0 0
        %492 = vmatpush1.bf16.msra.mxu0 0
        %493 = vmatprep.subr.bf16.mxu0 0
        %494 = vmatpush1.bf16.msra.mxu0 0
        %495 = vmatprep.subr.bf16.mxu0 0
        %496 = vmatpush1.bf16.msra.mxu0 0
        %497 = vmatprep.subr.bf16.mxu0 0
        %498 = vmatpush1.bf16.msra.mxu0 0
        %499 = vmatprep.subr.bf16.mxu0 0
        %500 = vmatpush1.bf16.msra.mxu0 0
        %501 = vmatprep.subr.bf16.mxu0 0
        %502 = vmatpush1.bf16.msra.mxu0 0
        %503 = vmatprep.subr.bf16.mxu0 0
        %504 = vmatpush1.bf16.msra.mxu0 0
        %505 = vmatprep.subr.bf16.mxu0 0
        %506 = vmatpush1.bf16.msra.mxu0 0
        %507 = vmatprep.subr.bf16.mxu0 0
        %508 = vmatpush1.bf16.msra.mxu0 0
        %509 = vmatprep.subr.bf16.mxu0 0
        %510 = vmatpush1.bf16.msra.mxu0 0
        %511 = vmatprep.subr.bf16.mxu0 0
        %512 = vmatpush1.bf16.msra.mxu0 0
        %513 = vmatprep.subr.bf16.mxu0 0
        %514 = vmatpush1.bf16.msra.mxu0 0
        %515 = vmatprep.subr.bf16.mxu0 0
        %516 = vmatpush1.bf16.msra.mxu0 0
        %517 = vmatprep.mubr.bf16.mxu0 0
        %518 = vmatmul.mubr.bf16.gmra.mrb[0].mxu0 %v483
        %v519 = vpop.f32.mrb[0].mxu0
        %v520 = vadd.f32 %v416, %v519
        %v521 = vpop.f32.mrb[0].mxu0
        %v522 = vpop.f32.mrb[0].mxu0
        %v523 = vadd.f32 %v417, %v522
        %v524 = vpop.f32.mrb[0].mxu0
        %525 = vdwg.mxu0
        %v527 = vsel %vm301, %v400, 0
        %529 = vmatprep.subr.bf16.mxu0 0
        %530 = vmatpush1.bf16.msra.mxu0 %v432
        %531 = vmatprep.subr.bf16.mxu0 0
        %532 = vmatpush1.bf16.msra.mxu0 0
        %533 = vmatprep.subr.bf16.mxu0 0
        %534 = vmatpush1.bf16.msra.mxu0 0
        %535 = vmatprep.subr.bf16.mxu0 0
        %536 = vmatpush1.bf16.msra.mxu0 0
        %537 = vmatprep.subr.bf16.mxu0 0
        %538 = vmatpush1.bf16.msra.mxu0 0
        %539 = vmatprep.subr.bf16.mxu0 0
        %540 = vmatpush1.bf16.msra.mxu0 0
        %541 = vmatprep.subr.bf16.mxu0 0
        %542 = vmatpush1.bf16.msra.mxu0 0
        %543 = vmatprep.subr.bf16.mxu0 0
        %544 = vmatpush1.bf16.msra.mxu0 0
        %545 = vmatprep.subr.bf16.mxu0 0
        %546 = vmatpush1.bf16.msra.mxu0 0
        %547 = vmatprep.subr.bf16.mxu0 0
        %548 = vmatpush1.bf16.msra.mxu0 0
        %549 = vmatprep.subr.bf16.mxu0 0
        %550 = vmatpush1.bf16.msra.mxu0 0
        %551 = vmatprep.subr.bf16.mxu0 0
        %552 = vmatpush1.bf16.msra.mxu0 0
        %553 = vmatprep.subr.bf16.mxu0 0
        %554 = vmatpush1.bf16.msra.mxu0 0
        %555 = vmatprep.subr.bf16.mxu0 0
        %556 = vmatpush1.bf16.msra.mxu0 0
        %557 = vmatprep.subr.bf16.mxu0 0
        %558 = vmatpush1.bf16.msra.mxu0 0
        %559 = vmatprep.subr.bf16.mxu0 0
        %560 = vmatpush1.bf16.msra.mxu0 0
        %561 = vmatprep.mubr.bf16.mxu0 0
        %562 = vmatmul.mubr.bf16.gmra.mrb[0].mxu0 %v527
        %v563 = vpop.f32.mrb[0].mxu0
        %v564 = vadd.f32 %v418, %v563
        %v565 = vpop.f32.mrb[0].mxu0
        %v566 = vpop.f32.mrb[0].mxu0
        %v567 = vadd.f32 %v419, %v566
        %v568 = vpop.f32.mrb[0].mxu0
        %569 = vdwg.mxu0
        %v571 = vsel %vm301, %v401, 0
        %573 = vmatprep.subr.bf16.mxu0 0
        %574 = vmatpush1.bf16.msra.mxu0 %v433
        %575 = vmatprep.subr.bf16.mxu0 0
        %576 = vmatpush1.bf16.msra.mxu0 0
        %577 = vmatprep.subr.bf16.mxu0 0
        %578 = vmatpush1.bf16.msra.mxu0 0
        %579 = vmatprep.subr.bf16.mxu0 0
        %580 = vmatpush1.bf16.msra.mxu0 0
        %581 = vmatprep.subr.bf16.mxu0 0
        %582 = vmatpush1.bf16.msra.mxu0 0
        %583 = vmatprep.subr.bf16.mxu0 0
        %584 = vmatpush1.bf16.msra.mxu0 0
        %585 = vmatprep.subr.bf16.mxu0 0
        %586 = vmatpush1.bf16.msra.mxu0 0
        %587 = vmatprep.subr.bf16.mxu0 0
        %588 = vmatpush1.bf16.msra.mxu0 0
        %589 = vmatprep.subr.bf16.mxu0 0
        %590 = vmatpush1.bf16.msra.mxu0 0
        %591 = vmatprep.subr.bf16.mxu0 0
        %592 = vmatpush1.bf16.msra.mxu0 0
        %593 = vmatprep.subr.bf16.mxu0 0
        %594 = vmatpush1.bf16.msra.mxu0 0
        %595 = vmatprep.subr.bf16.mxu0 0
        %596 = vmatpush1.bf16.msra.mxu0 0
        %597 = vmatprep.subr.bf16.mxu0 0
        %598 = vmatpush1.bf16.msra.mxu0 0
        %599 = vmatprep.subr.bf16.mxu0 0
        %600 = vmatpush1.bf16.msra.mxu0 0
        %601 = vmatprep.subr.bf16.mxu0 0
        %602 = vmatpush1.bf16.msra.mxu0 0
        %603 = vmatprep.subr.bf16.mxu0 0
        %604 = vmatpush1.bf16.msra.mxu0 0
        %605 = vmatprep.mubr.bf16.mxu0 0
        %606 = vmatmul.mubr.bf16.gmra.mrb[0].mxu0 %v571
        %v607 = vpop.f32.mrb[0].mxu0
        %v608 = vadd.f32 %v420, %v607
        %v609 = vpop.f32.mrb[0].mxu0
        %v610 = vpop.f32.mrb[0].mxu0
        %v611 = vadd.f32 %v421, %v610
        %v612 = vpop.f32.mrb[0].mxu0
        %613 = vdwg.mxu0
        %v615 = vsel %vm301, %v402, 0
        %617 = vmatprep.subr.bf16.mxu0 0
        %618 = vmatpush1.bf16.msra.mxu0 %v434
        %619 = vmatprep.subr.bf16.mxu0 0
        %620 = vmatpush1.bf16.msra.mxu0 0
        %621 = vmatprep.subr.bf16.mxu0 0
        %622 = vmatpush1.bf16.msra.mxu0 0
        %623 = vmatprep.subr.bf16.mxu0 0
        %624 = vmatpush1.bf16.msra.mxu0 0
        %625 = vmatprep.subr.bf16.mxu0 0
        %626 = vmatpush1.bf16.msra.mxu0 0
        %627 = vmatprep.subr.bf16.mxu0 0
        %628 = vmatpush1.bf16.msra.mxu0 0
        %629 = vmatprep.subr.bf16.mxu0 0
        %630 = vmatpush1.bf16.msra.mxu0 0
        %631 = vmatprep.subr.bf16.mxu0 0
        %632 = vmatpush1.bf16.msra.mxu0 0
        %633 = vmatprep.subr.bf16.mxu0 0
        %634 = vmatpush1.bf16.msra.mxu0 0
        %635 = vmatprep.subr.bf16.mxu0 0
        %636 = vmatpush1.bf16.msra.mxu0 0
        %637 = vmatprep.subr.bf16.mxu0 0
        %638 = vmatpush1.bf16.msra.mxu0 0
        %639 = vmatprep.subr.bf16.mxu0 0
        %640 = vmatpush1.bf16.msra.mxu0 0
        %641 = vmatprep.subr.bf16.mxu0 0
        %642 = vmatpush1.bf16.msra.mxu0 0
        %643 = vmatprep.subr.bf16.mxu0 0
        %644 = vmatpush1.bf16.msra.mxu0 0
        %645 = vmatprep.subr.bf16.mxu0 0
        %646 = vmatpush1.bf16.msra.mxu0 0
        %647 = vmatprep.subr.bf16.mxu0 0
        %648 = vmatpush1.bf16.msra.mxu0 0
        %649 = vmatprep.mubr.bf16.mxu0 0
        %650 = vmatmul.mubr.bf16.gmra.mrb[0].mxu0 %v615
        %v651 = vpop.f32.mrb[0].mxu0
        %v652 = vadd.f32 %v422, %v651
        %v653 = vpop.f32.mrb[0].mxu0
        %v654 = vpop.f32.mrb[0].mxu0
        %v655 = vadd.f32 %v423, %v654
        %v656 = vpop.f32.mrb[0].mxu0
        %657 = vdwg.mxu0
        %v659 = vsel %vm301, %v403, 0
        %661 = vmatprep.subr.bf16.mxu0 0
        %662 = vmatpush1.bf16.msra.mxu0 %v435
        %663 = vmatprep.subr.bf16.mxu0 0
        %664 = vmatpush1.bf16.msra.mxu0 0
        %665 = vmatprep.subr.bf16.mxu0 0
        %666 = vmatpush1.bf16.msra.mxu0 0
        %667 = vmatprep.subr.bf16.mxu0 0
        %668 = vmatpush1.bf16.msra.mxu0 0
        %669 = vmatprep.subr.bf16.mxu0 0
        %670 = vmatpush1.bf16.msra.mxu0 0
        %671 = vmatprep.subr.bf16.mxu0 0
        %672 = vmatpush1.bf16.msra.mxu0 0
        %673 = vmatprep.subr.bf16.mxu0 0
        %674 = vmatpush1.bf16.msra.mxu0 0
        %675 = vmatprep.subr.bf16.mxu0 0
        %676 = vmatpush1.bf16.msra.mxu0 0
        %677 = vmatprep.subr.bf16.mxu0 0
        %678 = vmatpush1.bf16.msra.mxu0 0
        %679 = vmatprep.subr.bf16.mxu0 0
        %680 = vmatpush1.bf16.msra.mxu0 0
        %681 = vmatprep.subr.bf16.mxu0 0
        %682 = vmatpush1.bf16.msra.mxu0 0
        %683 = vmatprep.subr.bf16.mxu0 0
        %684 = vmatpush1.bf16.msra.mxu0 0
        %685 = vmatprep.subr.bf16.mxu0 0
        %686 = vmatpush1.bf16.msra.mxu0 0
        %687 = vmatprep.subr.bf16.mxu0 0
        %688 = vmatpush1.bf16.msra.mxu0 0
        %689 = vmatprep.subr.bf16.mxu0 0
        %690 = vmatpush1.bf16.msra.mxu0 0
        %691 = vmatprep.subr.bf16.mxu0 0
        %692 = vmatpush1.bf16.msra.mxu0 0
        %693 = vmatprep.mubr.bf16.mxu0 0
        %694 = vmatmul.mubr.bf16.gmra.mrb[0].mxu0 %v659
        %v695 = vpop.f32.mrb[0].mxu0
        %v696 = vadd.f32 %v424, %v695
        %v697 = vpop.f32.mrb[0].mxu0
        %v698 = vpop.f32.mrb[0].mxu0
        %v699 = vadd.f32 %v425, %v698
        %v700 = vpop.f32.mrb[0].mxu0
        %701 = vdwg.mxu0
        %v703 = vsel %vm301, %v404, 0
        %705 = vmatprep.subr.bf16.mxu0 0
        %706 = vmatpush1.bf16.msra.mxu0 %v436
        %707 = vmatprep.subr.bf16.mxu0 0
        %708 = vmatpush1.bf16.msra.mxu0 0
        %709 = vmatprep.subr.bf16.mxu0 0
        %710 = vmatpush1.bf16.msra.mxu0 0
        %711 = vmatprep.subr.bf16.mxu0 0
        %712 = vmatpush1.bf16.msra.mxu0 0
        %713 = vmatprep.subr.bf16.mxu0 0
        %714 = vmatpush1.bf16.msra.mxu0 0
        %715 = vmatprep.subr.bf16.mxu0 0
        %716 = vmatpush1.bf16.msra.mxu0 0
        %717 = vmatprep.subr.bf16.mxu0 0
        %718 = vmatpush1.bf16.msra.mxu0 0
        %719 = vmatprep.subr.bf16.mxu0 0
        %720 = vmatpush1.bf16.msra.mxu0 0
        %721 = vmatprep.subr.bf16.mxu0 0
        %722 = vmatpush1.bf16.msra.mxu0 0
        %723 = vmatprep.subr.bf16.mxu0 0
        %724 = vmatpush1.bf16.msra.mxu0 0
        %725 = vmatprep.subr.bf16.mxu0 0
        %726 = vmatpush1.bf16.msra.mxu0 0
        %727 = vmatprep.subr.bf16.mxu0 0
        %728 = vmatpush1.bf16.msra.mxu0 0
        %729 = vmatprep.subr.bf16.mxu0 0
        %730 = vmatpush1.bf16.msra.mxu0 0
        %731 = vmatprep.subr.bf16.mxu0 0
        %732 = vmatpush1.bf16.msra.mxu0 0
        %733 = vmatprep.subr.bf16.mxu0 0
        %734 = vmatpush1.bf16.msra.mxu0 0
        %735 = vmatprep.subr.bf16.mxu0 0
        %736 = vmatpush1.bf16.msra.mxu0 0
        %737 = vmatprep.mubr.bf16.mxu0 0
        %738 = vmatmul.mubr.bf16.gmra.mrb[0].mxu0 %v703
        %v739 = vpop.f32.mrb[0].mxu0
        %v740 = vadd.f32 %v426, %v739
        %v741 = vpop.f32.mrb[0].mxu0
        %v742 = vpop.f32.mrb[0].mxu0
        %v743 = vadd.f32 %v427, %v742
        %v744 = vpop.f32.mrb[0].mxu0
        %745 = vdwg.mxu0
        %v747 = vsel %vm301, %v405, 0
        %749 = vmatprep.subr.bf16.mxu0 0
        %750 = vmatpush1.bf16.msra.mxu0 %v437
        %751 = vmatprep.subr.bf16.mxu0 0
        %752 = vmatpush1.bf16.msra.mxu0 0
        %753 = vmatprep.subr.bf16.mxu0 0
        %754 = vmatpush1.bf16.msra.mxu0 0
        %755 = vmatprep.subr.bf16.mxu0 0
        %756 = vmatpush1.bf16.msra.mxu0 0
        %757 = vmatprep.subr.bf16.mxu0 0
        %758 = vmatpush1.bf16.msra.mxu0 0
        %759 = vmatprep.subr.bf16.mxu0 0
        %760 = vmatpush1.bf16.msra.mxu0 0
        %761 = vmatprep.subr.bf16.mxu0 0
        %762 = vmatpush1.bf16.msra.mxu0 0
        %763 = vmatprep.subr.bf16.mxu0 0
        %764 = vmatpush1.bf16.msra.mxu0 0
        %765 = vmatprep.subr.bf16.mxu0 0
        %766 = vmatpush1.bf16.msra.mxu0 0
        %767 = vmatprep.subr.bf16.mxu0 0
        %768 = vmatpush1.bf16.msra.mxu0 0
        %769 = vmatprep.subr.bf16.mxu0 0
        %770 = vmatpush1.bf16.msra.mxu0 0
        %771 = vmatprep.subr.bf16.mxu0 0
        %772 = vmatpush1.bf16.msra.mxu0 0
        %773 = vmatprep.subr.bf16.mxu0 0
        %774 = vmatpush1.bf16.msra.mxu0 0
        %775 = vmatprep.subr.bf16.mxu0 0
        %776 = vmatpush1.bf16.msra.mxu0 0
        %777 = vmatprep.subr.bf16.mxu0 0
        %778 = vmatpush1.bf16.msra.mxu0 0
        %779 = vmatprep.subr.bf16.mxu0 0
        %780 = vmatpush1.bf16.msra.mxu0 0
        %781 = vmatprep.mubr.bf16.mxu0 0
        %782 = vmatmul.mubr.bf16.gmra.mrb[0].mxu0 %v747
        %v783 = vpop.f32.mrb[0].mxu0
        %v784 = vadd.f32 %v428, %v783
        %v785 = vpop.f32.mrb[0].mxu0
        %v786 = vpop.f32.mrb[0].mxu0
        %v787 = vadd.f32 %v429, %v786
        %v788 = vpop.f32.mrb[0].mxu0
        %789 = vdwg.mxu0
        %v790 = vmul.f32 %v382, %v476
        %v791 = vmul.f32 %v383, %v479
        %v792 = vmul.f32 %v384, %v520
        %v793 = vmul.f32 %v385, %v523
        %v794 = vmul.f32 %v386, %v564
        %v795 = vmul.f32 %v387, %v567
        %v796 = vmul.f32 %v388, %v608
        %v797 = vmul.f32 %v389, %v611
        %v798 = vmul.f32 %v390, %v652
        %v799 = vmul.f32 %v391, %v655
        %v800 = vmul.f32 %v392, %v696
        %v801 = vmul.f32 %v393, %v699
        %v802 = vmul.f32 %v394, %v740
        %v803 = vmul.f32 %v395, %v743
        %v804 = vmul.f32 %v396, %v784
        %v805 = vmul.f32 %v397, %v787
        %v806 = vmax.f32 %v790, 0.0
        %v807 = vmax.f32 %v791, 0.0
        %v808 = vmax.f32 %v792, 0.0
        %v809 = vmax.f32 %v793, 0.0
        %v810 = vmax.f32 %v794, 0.0
        %v811 = vmax.f32 %v795, 0.0
        %v812 = vmax.f32 %v796, 0.0
        %v813 = vmax.f32 %v797, 0.0
        %v814 = vmax.f32 %v798, 0.0
        %v815 = vmax.f32 %v799, 0.0
        %v816 = vmax.f32 %v800, 0.0
        %v817 = vmax.f32 %v801, 0.0
        %v818 = vmax.f32 %v802, 0.0
        %v819 = vmax.f32 %v803, 0.0
        %v820 = vmax.f32 %v804, 0.0
        %v821 = vmax.f32 %v805, 0.0
        %v822 = vpack.c.bf16 %v807, %v806
        %v823 = vpack.c.bf16 %v809, %v808
        %v824 = vpack.c.bf16 %v811, %v810
        %v825 = vpack.c.bf16 %v813, %v812
        %v826 = vpack.c.bf16 %v815, %v814
        %v827 = vpack.c.bf16 %v817, %v816
        %v828 = vpack.c.bf16 %v819, %v818
        %v829 = vpack.c.bf16 %v821, %v820
        %v834 = vunpack.c.l.b16 %v408
        %v835 = vunpack.c.l.b16 %v409
        %v836 = vunpack.c.l.b16 %v410
        %v837 = vunpack.c.l.b16 %v411
        %v838 = vpack.c.b16 %v835, %v834
        %v839 = vpack.c.b16 %v837, %v836
        %vm842 = vcmask 261120
        %v844 = vsel %vm842, %v822, 0
        %v847 = vsel %vm842, %v823, 0
        %v850 = vsel %vm842, %v824, 0
        %v853 = vsel %vm842, %v825, 0
        %v856 = vsel %vm842, %v826, 0
        %v859 = vsel %vm842, %v827, 0
        %v862 = vsel %vm842, %v828, 0
        %v865 = vsel %vm842, %v829, 0
        %867 = vmatprep.subr.bf16.mxu0 0
        %868 = vmatpush1.bf16.msra.mxu0 %v838
        %869 = vmatprep.subr.bf16.mxu0 0
        %870 = vmatpush1.bf16.msra.mxu0 %v839
        %871 = vmatprep.subr.bf16.mxu0 0
        %872 = vmatpush1.bf16.msra.mxu0 0
        %873 = vmatprep.subr.bf16.mxu0 0
        %874 = vmatpush1.bf16.msra.mxu0 0
        %875 = vmatprep.subr.bf16.mxu0 0
        %876 = vmatpush1.bf16.msra.mxu0 0
        %877 = vmatprep.subr.bf16.mxu0 0
        %878 = vmatpush1.bf16.msra.mxu0 0
        %879 = vmatprep.subr.bf16.mxu0 0
        %880 = vmatpush1.bf16.msra.mxu0 0
        %881 = vmatprep.subr.bf16.mxu0 0
        %882 = vmatpush1.bf16.msra.mxu0 0
        %883 = vmatprep.subr.bf16.mxu0 0
        %884 = vmatpush1.bf16.msra.mxu0 0
        %885 = vmatprep.subr.bf16.mxu0 0
        %886 = vmatpush1.bf16.msra.mxu0 0
        %887 = vmatprep.subr.bf16.mxu0 0
        %888 = vmatpush1.bf16.msra.mxu0 0
        %889 = vmatprep.subr.bf16.mxu0 0
        %890 = vmatpush1.bf16.msra.mxu0 0
        %891 = vmatprep.subr.bf16.mxu0 0
        %892 = vmatpush1.bf16.msra.mxu0 0
        %893 = vmatprep.subr.bf16.mxu0 0
        %894 = vmatpush1.bf16.msra.mxu0 0
        %895 = vmatprep.subr.bf16.mxu0 0
        %896 = vmatpush1.bf16.msra.mxu0 0
        %897 = vmatprep.subr.bf16.mxu0 0
        %898 = vmatpush1.bf16.msra.mxu0 0
        %899 = vmatprep.mubr.bf16.mxu0 0
        %900 = vmatmul.mubr.bf16.gmra.mrb[0].mxu0 %v844
        %v901 = vpop.f32.mrb[0].mxu0
        %v902 = vadd.f32 0.0, %v901
        %v903 = vpop.f32.mrb[0].mxu0
        %v904 = vpop.f32.mrb[0].mxu0
        %v905 = vadd.f32 0.0, %v904
        %v906 = vpop.f32.mrb[0].mxu0
        %907 = vmatprep.mubr.bf16.mxu0 0
        %908 = vmatmul.mubr.bf16.gmra.mrb[0].mxu0 %v847
        %v909 = vpop.f32.mrb[0].mxu0
        %v910 = vadd.f32 0.0, %v909
        %v911 = vpop.f32.mrb[0].mxu0
        %v912 = vpop.f32.mrb[0].mxu0
        %v913 = vadd.f32 0.0, %v912
        %v914 = vpop.f32.mrb[0].mxu0
        %915 = vmatprep.mubr.bf16.mxu0 0
        %916 = vmatmul.mubr.bf16.gmra.mrb[0].mxu0 %v850
        %v917 = vpop.f32.mrb[0].mxu0
        %v918 = vadd.f32 0.0, %v917
        %v919 = vpop.f32.mrb[0].mxu0
        %v920 = vpop.f32.mrb[0].mxu0
        %v921 = vadd.f32 0.0, %v920
        %v922 = vpop.f32.mrb[0].mxu0
        %923 = vmatprep.mubr.bf16.mxu0 0
        %924 = vmatmul.mubr.bf16.gmra.mrb[0].mxu0 %v853
        %v925 = vpop.f32.mrb[0].mxu0
        %v926 = vadd.f32 0.0, %v925
        %v927 = vpop.f32.mrb[0].mxu0
        %v928 = vpop.f32.mrb[0].mxu0
        %v929 = vadd.f32 0.0, %v928
        %v930 = vpop.f32.mrb[0].mxu0
        %931 = vmatprep.mubr.bf16.mxu0 0
        %932 = vmatmul.mubr.bf16.gmra.mrb[0].mxu0 %v856
        %v933 = vpop.f32.mrb[0].mxu0
        %v934 = vadd.f32 0.0, %v933
        %v935 = vpop.f32.mrb[0].mxu0
        %v936 = vpop.f32.mrb[0].mxu0
        %v937 = vadd.f32 0.0, %v936
        %v938 = vpop.f32.mrb[0].mxu0
        %939 = vmatprep.mubr.bf16.mxu0 0
        %940 = vmatmul.mubr.bf16.gmra.mrb[0].mxu0 %v859
        %v941 = vpop.f32.mrb[0].mxu0
        %v942 = vadd.f32 0.0, %v941
        %v943 = vpop.f32.mrb[0].mxu0
        %v944 = vpop.f32.mrb[0].mxu0
        %v945 = vadd.f32 0.0, %v944
        %v946 = vpop.f32.mrb[0].mxu0
        %947 = vmatprep.mubr.bf16.mxu0 0
        %948 = vmatmul.mubr.bf16.gmra.mrb[0].mxu0 %v862
        %v949 = vpop.f32.mrb[0].mxu0
        %v950 = vadd.f32 0.0, %v949
        %v951 = vpop.f32.mrb[0].mxu0
        %v952 = vpop.f32.mrb[0].mxu0
        %v953 = vadd.f32 0.0, %v952
        %v954 = vpop.f32.mrb[0].mxu0
        %955 = vmatprep.mubr.bf16.mxu0 0
        %956 = vmatmul.mubr.bf16.gmra.mrb[0].mxu0 %v865
        %v957 = vpop.f32.mrb[0].mxu0
        %v958 = vadd.f32 0.0, %v957
        %v959 = vpop.f32.mrb[0].mxu0
        %v960 = vpop.f32.mrb[0].mxu0
        %v961 = vadd.f32 0.0, %v960
        %v962 = vpop.f32.mrb[0].mxu0
        %963 = vdwg.mxu0
        %v964 = vmul.f32 %v382, %v902
        %v965 = vmul.f32 %v383, %v905
        %v966 = vmul.f32 %v384, %v910
        %v967 = vmul.f32 %v385, %v913
        %v968 = vmul.f32 %v386, %v918
        %v969 = vmul.f32 %v387, %v921
        %v970 = vmul.f32 %v388, %v926
        %v971 = vmul.f32 %v389, %v929
        %v972 = vmul.f32 %v390, %v934
        %v973 = vmul.f32 %v391, %v937
        %v974 = vmul.f32 %v392, %v942
        %v975 = vmul.f32 %v393, %v945
        %v976 = vmul.f32 %v394, %v950
        %v977 = vmul.f32 %v395, %v953
        %v978 = vmul.f32 %v396, %v958
        %v979 = vmul.f32 %v397, %v961
        %v980 = vpack.c.bf16 %v965, %v964
        %v981 = vpack.c.bf16 %v967, %v966
        %v982 = vpack.c.bf16 %v969, %v968
        %v983 = vpack.c.bf16 %v971, %v970
        %v984 = vpack.c.bf16 %v973, %v972
        %v985 = vpack.c.bf16 %v975, %v974
        %v986 = vpack.c.bf16 %v977, %v976
        %v987 = vpack.c.bf16 %v979, %v978
        %988 = vmatprep.subr.bf16.mxu0 0
        %989 = vmatpush1.bf16.msra.mxu0 %v980
        %990 = vmatprep.subr.bf16.mxu0 0
        %991 = vmatpush1.bf16.msra.mxu0 0
        %992 = vmatprep.subr.bf16.mxu0 0
        %993 = vmatpush1.bf16.msra.mxu0 0
        %994 = vmatprep.subr.bf16.mxu0 0
        %995 = vmatpush1.bf16.msra.mxu0 0
        %996 = vmatprep.subr.bf16.mxu0 0
        %997 = vmatpush1.bf16.msra.mxu0 0
        %998 = vmatprep.subr.bf16.mxu0 0
        %999 = vmatpush1.bf16.msra.mxu0 0
        %1000 = vmatprep.subr.bf16.mxu0 0
        %1001 = vmatpush1.bf16.msra.mxu0 0
        %1002 = vmatprep.subr.bf16.mxu0 0
        %1003 = vmatpush1.bf16.msra.mxu0 0
        %1004 = vmatprep.subr.bf16.mxu0 0
        %1005 = vmatpush1.bf16.msra.mxu0 0
        %1006 = vmatprep.subr.bf16.mxu0 0
        %1007 = vmatpush1.bf16.msra.mxu0 0
        %1008 = vmatprep.subr.bf16.mxu0 0
        %1009 = vmatpush1.bf16.msra.mxu0 0
        %1010 = vmatprep.subr.bf16.mxu0 0
        %1011 = vmatpush1.bf16.msra.mxu0 0
        %1012 = vmatprep.subr.bf16.mxu0 0
        %1013 = vmatpush1.bf16.msra.mxu0 0
        %1014 = vmatprep.subr.bf16.mxu0 0
        %1015 = vmatpush1.bf16.msra.mxu0 0
        %1016 = vmatprep.subr.bf16.mxu0 0
        %1017 = vmatpush1.bf16.msra.mxu0 0
        %1018 = vmatprep.subr.bf16.mxu0 0
        %1019 = vmatpush1.bf16.msra.mxu0 0
        %1020 = vmatprep.mubr.bf16.mxu0 0
        %1021 = vmatmul.mubr.bf16.gmra.mrb[0].mxu0 %v439
        %v1022 = vpop.f32.mrb[0].mxu0
        %v1023 = vadd.f32 %v964, %v1022
        %v1024 = vpop.f32.mrb[0].mxu0
        %v1025 = vpop.f32.mrb[0].mxu0
        %v1026 = vadd.f32 %v965, %v1025
        %v1027 = vpop.f32.mrb[0].mxu0
        %1028 = vdwg.mxu0
        %1029 = vmatprep.subr.bf16.mxu0 0
        %1030 = vmatpush1.bf16.msra.mxu0 %v981
        %1031 = vmatprep.subr.bf16.mxu0 0
        %1032 = vmatpush1.bf16.msra.mxu0 0
        %1033 = vmatprep.subr.bf16.mxu0 0
        %1034 = vmatpush1.bf16.msra.mxu0 0
        %1035 = vmatprep.subr.bf16.mxu0 0
        %1036 = vmatpush1.bf16.msra.mxu0 0
        %1037 = vmatprep.subr.bf16.mxu0 0
        %1038 = vmatpush1.bf16.msra.mxu0 0
        %1039 = vmatprep.subr.bf16.mxu0 0
        %1040 = vmatpush1.bf16.msra.mxu0 0
        %1041 = vmatprep.subr.bf16.mxu0 0
        %1042 = vmatpush1.bf16.msra.mxu0 0
        %1043 = vmatprep.subr.bf16.mxu0 0
        %1044 = vmatpush1.bf16.msra.mxu0 0
        %1045 = vmatprep.subr.bf16.mxu0 0
        %1046 = vmatpush1.bf16.msra.mxu0 0
        %1047 = vmatprep.subr.bf16.mxu0 0
        %1048 = vmatpush1.bf16.msra.mxu0 0
        %1049 = vmatprep.subr.bf16.mxu0 0
        %1050 = vmatpush1.bf16.msra.mxu0 0
        %1051 = vmatprep.subr.bf16.mxu0 0
        %1052 = vmatpush1.bf16.msra.mxu0 0
        %1053 = vmatprep.subr.bf16.mxu0 0
        %1054 = vmatpush1.bf16.msra.mxu0 0
        %1055 = vmatprep.subr.bf16.mxu0 0
        %1056 = vmatpush1.bf16.msra.mxu0 0
        %1057 = vmatprep.subr.bf16.mxu0 0
        %1058 = vmatpush1.bf16.msra.mxu0 0
        %1059 = vmatprep.subr.bf16.mxu0 0
        %1060 = vmatpush1.bf16.msra.mxu0 0
        %1061 = vmatprep.mubr.bf16.mxu0 0
        %1062 = vmatmul.mubr.bf16.gmra.mrb[0].mxu0 %v483
        %v1063 = vpop.f32.mrb[0].mxu0
        %v1064 = vadd.f32 %v966, %v1063
        %v1065 = vpop.f32.mrb[0].mxu0
        %v1066 = vpop.f32.mrb[0].mxu0
        %v1067 = vadd.f32 %v967, %v1066
        %v1068 = vpop.f32.mrb[0].mxu0
        %1069 = vdwg.mxu0
        %1070 = vmatprep.subr.bf16.mxu0 0
        %1071 = vmatpush1.bf16.msra.mxu0 %v982
        %1072 = vmatprep.subr.bf16.mxu0 0
        %1073 = vmatpush1.bf16.msra.mxu0 0
        %1074 = vmatprep.subr.bf16.mxu0 0
        %1075 = vmatpush1.bf16.msra.mxu0 0
        %1076 = vmatprep.subr.bf16.mxu0 0
        %1077 = vmatpush1.bf16.msra.mxu0 0
        %1078 = vmatprep.subr.bf16.mxu0 0
        %1079 = vmatpush1.bf16.msra.mxu0 0
        %1080 = vmatprep.subr.bf16.mxu0 0
        %1081 = vmatpush1.bf16.msra.mxu0 0
        %1082 = vmatprep.subr.bf16.mxu0 0
        %1083 = vmatpush1.bf16.msra.mxu0 0
        %1084 = vmatprep.subr.bf16.mxu0 0
        %1085 = vmatpush1.bf16.msra.mxu0 0
        %1086 = vmatprep.subr.bf16.mxu0 0
        %1087 = vmatpush1.bf16.msra.mxu0 0
        %1088 = vmatprep.subr.bf16.mxu0 0
        %1089 = vmatpush1.bf16.msra.mxu0 0
        %1090 = vmatprep.subr.bf16.mxu0 0
        %1091 = vmatpush1.bf16.msra.mxu0 0
        %1092 = vmatprep.subr.bf16.mxu0 0
        %1093 = vmatpush1.bf16.msra.mxu0 0
        %1094 = vmatprep.subr.bf16.mxu0 0
        %1095 = vmatpush1.bf16.msra.mxu0 0
        %1096 = vmatprep.subr.bf16.mxu0 0
        %1097 = vmatpush1.bf16.msra.mxu0 0
        %1098 = vmatprep.subr.bf16.mxu0 0
        %1099 = vmatpush1.bf16.msra.mxu0 0
        %1100 = vmatprep.subr.bf16.mxu0 0
        %1101 = vmatpush1.bf16.msra.mxu0 0
        %1102 = vmatprep.mubr.bf16.mxu0 0
        %1103 = vmatmul.mubr.bf16.gmra.mrb[0].mxu0 %v527
        %v1104 = vpop.f32.mrb[0].mxu0
        %v1105 = vadd.f32 %v968, %v1104
        %v1106 = vpop.f32.mrb[0].mxu0
        %v1107 = vpop.f32.mrb[0].mxu0
        %v1108 = vadd.f32 %v969, %v1107
        %v1109 = vpop.f32.mrb[0].mxu0
        %1110 = vdwg.mxu0
        %1111 = vmatprep.subr.bf16.mxu0 0
        %1112 = vmatpush1.bf16.msra.mxu0 %v983
        %1113 = vmatprep.subr.bf16.mxu0 0
        %1114 = vmatpush1.bf16.msra.mxu0 0
        %1115 = vmatprep.subr.bf16.mxu0 0
        %1116 = vmatpush1.bf16.msra.mxu0 0
        %1117 = vmatprep.subr.bf16.mxu0 0
        %1118 = vmatpush1.bf16.msra.mxu0 0
        %1119 = vmatprep.subr.bf16.mxu0 0
        %1120 = vmatpush1.bf16.msra.mxu0 0
        %1121 = vmatprep.subr.bf16.mxu0 0
        %1122 = vmatpush1.bf16.msra.mxu0 0
        %1123 = vmatprep.subr.bf16.mxu0 0
        %1124 = vmatpush1.bf16.msra.mxu0 0
        %1125 = vmatprep.subr.bf16.mxu0 0
        %1126 = vmatpush1.bf16.msra.mxu0 0
        %1127 = vmatprep.subr.bf16.mxu0 0
        %1128 = vmatpush1.bf16.msra.mxu0 0
        %1129 = vmatprep.subr.bf16.mxu0 0
        %1130 = vmatpush1.bf16.msra.mxu0 0
        %1131 = vmatprep.subr.bf16.mxu0 0
        %1132 = vmatpush1.bf16.msra.mxu0 0
        %1133 = vmatprep.subr.bf16.mxu0 0
        %1134 = vmatpush1.bf16.msra.mxu0 0
        %1135 = vmatprep.subr.bf16.mxu0 0
        %1136 = vmatpush1.bf16.msra.mxu0 0
        %1137 = vmatprep.subr.bf16.mxu0 0
        %1138 = vmatpush1.bf16.msra.mxu0 0
        %1139 = vmatprep.subr.bf16.mxu0 0
        %1140 = vmatpush1.bf16.msra.mxu0 0
        %1141 = vmatprep.subr.bf16.mxu0 0
        %1142 = vmatpush1.bf16.msra.mxu0 0
        %1143 = vmatprep.mubr.bf16.mxu0 0
        %1144 = vmatmul.mubr.bf16.gmra.mrb[0].mxu0 %v571
        %v1145 = vpop.f32.mrb[0].mxu0
        %v1146 = vadd.f32 %v970, %v1145
        %v1147 = vpop.f32.mrb[0].mxu0
        %v1148 = vpop.f32.mrb[0].mxu0
        %v1149 = vadd.f32 %v971, %v1148
        %v1150 = vpop.f32.mrb[0].mxu0
        %1151 = vdwg.mxu0
        %1152 = vmatprep.subr.bf16.mxu0 0
        %1153 = vmatpush1.bf16.msra.mxu0 %v984
        %1154 = vmatprep.subr.bf16.mxu0 0
        %1155 = vmatpush1.bf16.msra.mxu0 0
        %1156 = vmatprep.subr.bf16.mxu0 0
        %1157 = vmatpush1.bf16.msra.mxu0 0
        %1158 = vmatprep.subr.bf16.mxu0 0
        %1159 = vmatpush1.bf16.msra.mxu0 0
        %1160 = vmatprep.subr.bf16.mxu0 0
        %1161 = vmatpush1.bf16.msra.mxu0 0
        %1162 = vmatprep.subr.bf16.mxu0 0
        %1163 = vmatpush1.bf16.msra.mxu0 0
        %1164 = vmatprep.subr.bf16.mxu0 0
        %1165 = vmatpush1.bf16.msra.mxu0 0
        %1166 = vmatprep.subr.bf16.mxu0 0
        %1167 = vmatpush1.bf16.msra.mxu0 0
        %1168 = vmatprep.subr.bf16.mxu0 0
        %1169 = vmatpush1.bf16.msra.mxu0 0
        %1170 = vmatprep.subr.bf16.mxu0 0
        %1171 = vmatpush1.bf16.msra.mxu0 0
        %1172 = vmatprep.subr.bf16.mxu0 0
        %1173 = vmatpush1.bf16.msra.mxu0 0
        %1174 = vmatprep.subr.bf16.mxu0 0
        %1175 = vmatpush1.bf16.msra.mxu0 0
        %1176 = vmatprep.subr.bf16.mxu0 0
        %1177 = vmatpush1.bf16.msra.mxu0 0
        %1178 = vmatprep.subr.bf16.mxu0 0
        %1179 = vmatpush1.bf16.msra.mxu0 0
        %1180 = vmatprep.subr.bf16.mxu0 0
        %1181 = vmatpush1.bf16.msra.mxu0 0
        %1182 = vmatprep.subr.bf16.mxu0 0
        %1183 = vmatpush1.bf16.msra.mxu0 0
        %1184 = vmatprep.mubr.bf16.mxu0 0
        %1185 = vmatmul.mubr.bf16.gmra.mrb[0].mxu0 %v615
        %v1186 = vpop.f32.mrb[0].mxu0
        %v1187 = vadd.f32 %v972, %v1186
        %v1188 = vpop.f32.mrb[0].mxu0
        %v1189 = vpop.f32.mrb[0].mxu0
        %v1190 = vadd.f32 %v973, %v1189
        %v1191 = vpop.f32.mrb[0].mxu0
        %1192 = vdwg.mxu0
        %1193 = vmatprep.subr.bf16.mxu0 0
        %1194 = vmatpush1.bf16.msra.mxu0 %v985
        %1195 = vmatprep.subr.bf16.mxu0 0
        %1196 = vmatpush1.bf16.msra.mxu0 0
        %1197 = vmatprep.subr.bf16.mxu0 0
        %1198 = vmatpush1.bf16.msra.mxu0 0
        %1199 = vmatprep.subr.bf16.mxu0 0
        %1200 = vmatpush1.bf16.msra.mxu0 0
        %1201 = vmatprep.subr.bf16.mxu0 0
        %1202 = vmatpush1.bf16.msra.mxu0 0
        %1203 = vmatprep.subr.bf16.mxu0 0
        %1204 = vmatpush1.bf16.msra.mxu0 0
        %1205 = vmatprep.subr.bf16.mxu0 0
        %1206 = vmatpush1.bf16.msra.mxu0 0
        %1207 = vmatprep.subr.bf16.mxu0 0
        %1208 = vmatpush1.bf16.msra.mxu0 0
        %1209 = vmatprep.subr.bf16.mxu0 0
        %1210 = vmatpush1.bf16.msra.mxu0 0
        %1211 = vmatprep.subr.bf16.mxu0 0
        %1212 = vmatpush1.bf16.msra.mxu0 0
        %1213 = vmatprep.subr.bf16.mxu0 0
        %1214 = vmatpush1.bf16.msra.mxu0 0
        %1215 = vmatprep.subr.bf16.mxu0 0
        %1216 = vmatpush1.bf16.msra.mxu0 0
        %1217 = vmatprep.subr.bf16.mxu0 0
        %1218 = vmatpush1.bf16.msra.mxu0 0
        %1219 = vmatprep.subr.bf16.mxu0 0
        %1220 = vmatpush1.bf16.msra.mxu0 0
        %1221 = vmatprep.subr.bf16.mxu0 0
        %1222 = vmatpush1.bf16.msra.mxu0 0
        %1223 = vmatprep.subr.bf16.mxu0 0
        %1224 = vmatpush1.bf16.msra.mxu0 0
        %1225 = vmatprep.mubr.bf16.mxu0 0
        %1226 = vmatmul.mubr.bf16.gmra.mrb[0].mxu0 %v659
        %v1227 = vpop.f32.mrb[0].mxu0
        %v1228 = vadd.f32 %v974, %v1227
        %v1229 = vpop.f32.mrb[0].mxu0
        %v1230 = vpop.f32.mrb[0].mxu0
        %v1231 = vadd.f32 %v975, %v1230
        %v1232 = vpop.f32.mrb[0].mxu0
        %1233 = vdwg.mxu0
        %1234 = vmatprep.subr.bf16.mxu0 0
        %1235 = vmatpush1.bf16.msra.mxu0 %v986
        %1236 = vmatprep.subr.bf16.mxu0 0
        %1237 = vmatpush1.bf16.msra.mxu0 0
        %1238 = vmatprep.subr.bf16.mxu0 0
        %1239 = vmatpush1.bf16.msra.mxu0 0
        %1240 = vmatprep.subr.bf16.mxu0 0
        %1241 = vmatpush1.bf16.msra.mxu0 0
        %1242 = vmatprep.subr.bf16.mxu0 0
        %1243 = vmatpush1.bf16.msra.mxu0 0
        %1244 = vmatprep.subr.bf16.mxu0 0
        %1245 = vmatpush1.bf16.msra.mxu0 0
        %1246 = vmatprep.subr.bf16.mxu0 0
        %1247 = vmatpush1.bf16.msra.mxu0 0
        %1248 = vmatprep.subr.bf16.mxu0 0
        %1249 = vmatpush1.bf16.msra.mxu0 0
        %1250 = vmatprep.subr.bf16.mxu0 0
        %1251 = vmatpush1.bf16.msra.mxu0 0
        %1252 = vmatprep.subr.bf16.mxu0 0
        %1253 = vmatpush1.bf16.msra.mxu0 0
        %1254 = vmatprep.subr.bf16.mxu0 0
        %1255 = vmatpush1.bf16.msra.mxu0 0
        %1256 = vmatprep.subr.bf16.mxu0 0
        %1257 = vmatpush1.bf16.msra.mxu0 0
        %1258 = vmatprep.subr.bf16.mxu0 0
        %1259 = vmatpush1.bf16.msra.mxu0 0
        %1260 = vmatprep.subr.bf16.mxu0 0
        %1261 = vmatpush1.bf16.msra.mxu0 0
        %1262 = vmatprep.subr.bf16.mxu0 0
        %1263 = vmatpush1.bf16.msra.mxu0 0
        %1264 = vmatprep.subr.bf16.mxu0 0
        %1265 = vmatpush1.bf16.msra.mxu0 0
        %1266 = vmatprep.mubr.bf16.mxu0 0
        %1267 = vmatmul.mubr.bf16.gmra.mrb[0].mxu0 %v703
        %v1268 = vpop.f32.mrb[0].mxu0
        %v1269 = vadd.f32 %v976, %v1268
        %v1270 = vpop.f32.mrb[0].mxu0
        %v1271 = vpop.f32.mrb[0].mxu0
        %v1272 = vadd.f32 %v977, %v1271
        %v1273 = vpop.f32.mrb[0].mxu0
        %1274 = vdwg.mxu0
        %1275 = vmatprep.subr.bf16.mxu0 0
        %1276 = vmatpush1.bf16.msra.mxu0 %v987
        %1277 = vmatprep.subr.bf16.mxu0 0
        %1278 = vmatpush1.bf16.msra.mxu0 0
        %1279 = vmatprep.subr.bf16.mxu0 0
        %1280 = vmatpush1.bf16.msra.mxu0 0
        %1281 = vmatprep.subr.bf16.mxu0 0
        %1282 = vmatpush1.bf16.msra.mxu0 0
        %1283 = vmatprep.subr.bf16.mxu0 0
        %1284 = vmatpush1.bf16.msra.mxu0 0
        %1285 = vmatprep.subr.bf16.mxu0 0
        %1286 = vmatpush1.bf16.msra.mxu0 0
        %1287 = vmatprep.subr.bf16.mxu0 0
        %1288 = vmatpush1.bf16.msra.mxu0 0
        %1289 = vmatprep.subr.bf16.mxu0 0
        %1290 = vmatpush1.bf16.msra.mxu0 0
        %1291 = vmatprep.subr.bf16.mxu0 0
        %1292 = vmatpush1.bf16.msra.mxu0 0
        %1293 = vmatprep.subr.bf16.mxu0 0
        %1294 = vmatpush1.bf16.msra.mxu0 0
        %1295 = vmatprep.subr.bf16.mxu0 0
        %1296 = vmatpush1.bf16.msra.mxu0 0
        %1297 = vmatprep.subr.bf16.mxu0 0
        %1298 = vmatpush1.bf16.msra.mxu0 0
        %1299 = vmatprep.subr.bf16.mxu0 0
        %1300 = vmatpush1.bf16.msra.mxu0 0
        %1301 = vmatprep.subr.bf16.mxu0 0
        %1302 = vmatpush1.bf16.msra.mxu0 0
        %1303 = vmatprep.subr.bf16.mxu0 0
        %1304 = vmatpush1.bf16.msra.mxu0 0
        %1305 = vmatprep.subr.bf16.mxu0 0
        %1306 = vmatpush1.bf16.msra.mxu0 0
        %1307 = vmatprep.mubr.bf16.mxu0 0
        %1308 = vmatmul.mubr.bf16.gmra.mrb[0].mxu0 %v747
        %v1309 = vpop.f32.mrb[0].mxu0
        %v1310 = vadd.f32 %v978, %v1309
        %v1311 = vpop.f32.mrb[0].mxu0
        %v1312 = vpop.f32.mrb[0].mxu0
        %v1313 = vadd.f32 %v979, %v1312
        %v1314 = vpop.f32.mrb[0].mxu0
        %1315 = vdwg.mxu0
        %v1316 = vmul.f32 %v382, %v1023
        %v1317 = vmul.f32 %v383, %v1026
        %v1318 = vmul.f32 %v384, %v1064
        %v1319 = vmul.f32 %v385, %v1067
        %v1320 = vmul.f32 %v386, %v1105
        %v1321 = vmul.f32 %v387, %v1108
        %v1322 = vmul.f32 %v388, %v1146
        %v1323 = vmul.f32 %v389, %v1149
        %v1324 = vmul.f32 %v390, %v1187
        %v1325 = vmul.f32 %v391, %v1190
        %v1326 = vmul.f32 %v392, %v1228
        %v1327 = vmul.f32 %v393, %v1231
        %v1328 = vmul.f32 %v394, %v1269
        %v1329 = vmul.f32 %v395, %v1272
        %v1330 = vmul.f32 %v396, %v1310
        %v1331 = vmul.f32 %v397, %v1313
        %v1332 = vpack.c.bf16 %v1317, %v1316
        %v1333 = vpack.c.bf16 %v1319, %v1318
        %v1334 = vpack.c.bf16 %v1321, %v1320
        %v1335 = vpack.c.bf16 %v1323, %v1322
        %v1336 = vpack.c.bf16 %v1325, %v1324
        %v1337 = vpack.c.bf16 %v1327, %v1326
        %v1338 = vpack.c.bf16 %v1329, %v1328
        %v1339 = vpack.c.bf16 %v1331, %v1330
        %v1341 = vsel %vm842, %v1332, 0
        %1343 = vmatprep.subr.bf16.mxu0 0
        %1344 = vmatpush1.bf16.xpose.msra.mxu0 %v1341
        %1345 = vmatprep.subr.bf16.mxu0 0
        %1346 = vmatpush1.bf16.xpose.msra.mxu0 0
        %1347 = vmatprep.subr.bf16.mxu0 0
        %1348 = vmatpush1.bf16.xpose.msra.mxu0 0
        %1349 = vmatprep.subr.bf16.mxu0 0
        %1350 = vmatpush1.bf16.xpose.msra.mxu0 0
        %1351 = vmatprep.subr.bf16.mxu0 0
        %1352 = vmatpush1.bf16.xpose.msra.mxu0 0
        %1353 = vmatprep.subr.bf16.mxu0 0
        %1354 = vmatpush1.bf16.xpose.msra.mxu0 0
        %1355 = vmatprep.subr.bf16.mxu0 0
        %1356 = vmatpush1.bf16.xpose.msra.mxu0 0
        %1357 = vmatprep.subr.bf16.mxu0 0
        %1358 = vmatpush1.bf16.xpose.msra.mxu0 0
        %1359 = vmatprep.subr.bf16.mxu0 0
        %1360 = vmatpush1.bf16.xpose.msra.mxu0 0
        %1361 = vmatprep.subr.bf16.mxu0 0
        %1362 = vmatpush1.bf16.xpose.msra.mxu0 0
        %1363 = vmatprep.subr.bf16.mxu0 0
        %1364 = vmatpush1.bf16.xpose.msra.mxu0 0
        %1365 = vmatprep.subr.bf16.mxu0 0
        %1366 = vmatpush1.bf16.xpose.msra.mxu0 0
        %1367 = vmatprep.subr.bf16.mxu0 0
        %1368 = vmatpush1.bf16.xpose.msra.mxu0 0
        %1369 = vmatprep.subr.bf16.mxu0 0
        %1370 = vmatpush1.bf16.xpose.msra.mxu0 0
        %1371 = vmatprep.subr.bf16.mxu0 0
        %1372 = vmatpush1.bf16.xpose.msra.mxu0 0
        %1373 = vmatprep.subr.bf16.mxu0 0
        %1374 = vmatpush1.bf16.xpose.msra.mxu0 0
        %1375 = vmatprep.mubr.bf16.mxu0 0
        %1376 = vmatmul.mubr.bf16.gmra.mrb[0].mxu0 %v1341
        %v1377 = vpop.f32.mrb[0].mxu0
        %v1378 = vadd.f32 0.0, %v1377
        %v1379 = vpop.f32.mrb[0].mxu0
        %v1380 = vpop.f32.mrb[0].mxu0
        %v1381 = vadd.f32 0.0, %v1380
        %v1382 = vpop.f32.mrb[0].mxu0
        %1383 = vdwg.mxu0
        %v1385 = vsel %vm842, %v1333, 0
        %1387 = vmatprep.subr.bf16.mxu0 0
        %1388 = vmatpush1.bf16.xpose.msra.mxu0 %v1385
        %1389 = vmatprep.subr.bf16.mxu0 0
        %1390 = vmatpush1.bf16.xpose.msra.mxu0 0
        %1391 = vmatprep.subr.bf16.mxu0 0
        %1392 = vmatpush1.bf16.xpose.msra.mxu0 0
        %1393 = vmatprep.subr.bf16.mxu0 0
        %1394 = vmatpush1.bf16.xpose.msra.mxu0 0
        %1395 = vmatprep.subr.bf16.mxu0 0
        %1396 = vmatpush1.bf16.xpose.msra.mxu0 0
        %1397 = vmatprep.subr.bf16.mxu0 0
        %1398 = vmatpush1.bf16.xpose.msra.mxu0 0
        %1399 = vmatprep.subr.bf16.mxu0 0
        %1400 = vmatpush1.bf16.xpose.msra.mxu0 0
        %1401 = vmatprep.subr.bf16.mxu0 0
        %1402 = vmatpush1.bf16.xpose.msra.mxu0 0
        %1403 = vmatprep.subr.bf16.mxu0 0
        %1404 = vmatpush1.bf16.xpose.msra.mxu0 0
        %1405 = vmatprep.subr.bf16.mxu0 0
        %1406 = vmatpush1.bf16.xpose.msra.mxu0 0
        %1407 = vmatprep.subr.bf16.mxu0 0
        %1408 = vmatpush1.bf16.xpose.msra.mxu0 0
        %1409 = vmatprep.subr.bf16.mxu0 0
        %1410 = vmatpush1.bf16.xpose.msra.mxu0 0
        %1411 = vmatprep.subr.bf16.mxu0 0
        %1412 = vmatpush1.bf16.xpose.msra.mxu0 0
        %1413 = vmatprep.subr.bf16.mxu0 0
        %1414 = vmatpush1.bf16.xpose.msra.mxu0 0
        %1415 = vmatprep.subr.bf16.mxu0 0
        %1416 = vmatpush1.bf16.xpose.msra.mxu0 0
        %1417 = vmatprep.subr.bf16.mxu0 0
        %1418 = vmatpush1.bf16.xpose.msra.mxu0 0
        %1419 = vmatprep.mubr.bf16.mxu0 0
        %1420 = vmatmul.mubr.bf16.gmra.mrb[0].mxu0 %v1385
        %v1421 = vpop.f32.mrb[0].mxu0
        %v1422 = vadd.f32 0.0, %v1421
        %v1423 = vpop.f32.mrb[0].mxu0
        %v1424 = vpop.f32.mrb[0].mxu0
        %v1425 = vadd.f32 0.0, %v1424
        %v1426 = vpop.f32.mrb[0].mxu0
        %1427 = vdwg.mxu0
        %v1429 = vsel %vm842, %v1334, 0
        %1431 = vmatprep.subr.bf16.mxu0 0
        %1432 = vmatpush1.bf16.xpose.msra.mxu0 %v1429
        %1433 = vmatprep.subr.bf16.mxu0 0
        %1434 = vmatpush1.bf16.xpose.msra.mxu0 0
        %1435 = vmatprep.subr.bf16.mxu0 0
        %1436 = vmatpush1.bf16.xpose.msra.mxu0 0
        %1437 = vmatprep.subr.bf16.mxu0 0
        %1438 = vmatpush1.bf16.xpose.msra.mxu0 0
        %1439 = vmatprep.subr.bf16.mxu0 0
        %1440 = vmatpush1.bf16.xpose.msra.mxu0 0
        %1441 = vmatprep.subr.bf16.mxu0 0
        %1442 = vmatpush1.bf16.xpose.msra.mxu0 0
        %1443 = vmatprep.subr.bf16.mxu0 0
        %1444 = vmatpush1.bf16.xpose.msra.mxu0 0
        %1445 = vmatprep.subr.bf16.mxu0 0
        %1446 = vmatpush1.bf16.xpose.msra.mxu0 0
        %1447 = vmatprep.subr.bf16.mxu0 0
        %1448 = vmatpush1.bf16.xpose.msra.mxu0 0
        %1449 = vmatprep.subr.bf16.mxu0 0
        %1450 = vmatpush1.bf16.xpose.msra.mxu0 0
        %1451 = vmatprep.subr.bf16.mxu0 0
        %1452 = vmatpush1.bf16.xpose.msra.mxu0 0
        %1453 = vmatprep.subr.bf16.mxu0 0
        %1454 = vmatpush1.bf16.xpose.msra.mxu0 0
        %1455 = vmatprep.subr.bf16.mxu0 0
        %1456 = vmatpush1.bf16.xpose.msra.mxu0 0
        %1457 = vmatprep.subr.bf16.mxu0 0
        %1458 = vmatpush1.bf16.xpose.msra.mxu0 0
        %1459 = vmatprep.subr.bf16.mxu0 0
        %1460 = vmatpush1.bf16.xpose.msra.mxu0 0
        %1461 = vmatprep.subr.bf16.mxu0 0
        %1462 = vmatpush1.bf16.xpose.msra.mxu0 0
        %1463 = vmatprep.mubr.bf16.mxu0 0
        %1464 = vmatmul.mubr.bf16.gmra.mrb[0].mxu0 %v1429
        %v1465 = vpop.f32.mrb[0].mxu0
        %v1466 = vadd.f32 0.0, %v1465
        %v1467 = vpop.f32.mrb[0].mxu0
        %v1468 = vpop.f32.mrb[0].mxu0
        %v1469 = vadd.f32 0.0, %v1468
        %v1470 = vpop.f32.mrb[0].mxu0
        %1471 = vdwg.mxu0
        %v1473 = vsel %vm842, %v1335, 0
        %1475 = vmatprep.subr.bf16.mxu0 0
        %1476 = vmatpush1.bf16.xpose.msra.mxu0 %v1473
        %1477 = vmatprep.subr.bf16.mxu0 0
        %1478 = vmatpush1.bf16.xpose.msra.mxu0 0
        %1479 = vmatprep.subr.bf16.mxu0 0
        %1480 = vmatpush1.bf16.xpose.msra.mxu0 0
        %1481 = vmatprep.subr.bf16.mxu0 0
        %1482 = vmatpush1.bf16.xpose.msra.mxu0 0
        %1483 = vmatprep.subr.bf16.mxu0 0
        %1484 = vmatpush1.bf16.xpose.msra.mxu0 0
        %1485 = vmatprep.subr.bf16.mxu0 0
        %1486 = vmatpush1.bf16.xpose.msra.mxu0 0
        %1487 = vmatprep.subr.bf16.mxu0 0
        %1488 = vmatpush1.bf16.xpose.msra.mxu0 0
        %1489 = vmatprep.subr.bf16.mxu0 0
        %1490 = vmatpush1.bf16.xpose.msra.mxu0 0
        %1491 = vmatprep.subr.bf16.mxu0 0
        %1492 = vmatpush1.bf16.xpose.msra.mxu0 0
        %1493 = vmatprep.subr.bf16.mxu0 0
        %1494 = vmatpush1.bf16.xpose.msra.mxu0 0
        %1495 = vmatprep.subr.bf16.mxu0 0
        %1496 = vmatpush1.bf16.xpose.msra.mxu0 0
        %1497 = vmatprep.subr.bf16.mxu0 0
        %1498 = vmatpush1.bf16.xpose.msra.mxu0 0
        %1499 = vmatprep.subr.bf16.mxu0 0
        %1500 = vmatpush1.bf16.xpose.msra.mxu0 0
        %1501 = vmatprep.subr.bf16.mxu0 0
        %1502 = vmatpush1.bf16.xpose.msra.mxu0 0
        %1503 = vmatprep.subr.bf16.mxu0 0
        %1504 = vmatpush1.bf16.xpose.msra.mxu0 0
        %1505 = vmatprep.subr.bf16.mxu0 0
        %1506 = vmatpush1.bf16.xpose.msra.mxu0 0
        %1507 = vmatprep.mubr.bf16.mxu0 0
        %1508 = vmatmul.mubr.bf16.gmra.mrb[0].mxu0 %v1473
        %v1509 = vpop.f32.mrb[0].mxu0
        %v1510 = vadd.f32 0.0, %v1509
        %v1511 = vpop.f32.mrb[0].mxu0
        %v1512 = vpop.f32.mrb[0].mxu0
        %v1513 = vadd.f32 0.0, %v1512
        %v1514 = vpop.f32.mrb[0].mxu0
        %1515 = vdwg.mxu0
        %v1517 = vsel %vm842, %v1336, 0
        %1519 = vmatprep.subr.bf16.mxu0 0
        %1520 = vmatpush1.bf16.xpose.msra.mxu0 %v1517
        %1521 = vmatprep.subr.bf16.mxu0 0
        %1522 = vmatpush1.bf16.xpose.msra.mxu0 0
        %1523 = vmatprep.subr.bf16.mxu0 0
        %1524 = vmatpush1.bf16.xpose.msra.mxu0 0
        %1525 = vmatprep.subr.bf16.mxu0 0
        %1526 = vmatpush1.bf16.xpose.msra.mxu0 0
        %1527 = vmatprep.subr.bf16.mxu0 0
        %1528 = vmatpush1.bf16.xpose.msra.mxu0 0
        %1529 = vmatprep.subr.bf16.mxu0 0
        %1530 = vmatpush1.bf16.xpose.msra.mxu0 0
        %1531 = vmatprep.subr.bf16.mxu0 0
        %1532 = vmatpush1.bf16.xpose.msra.mxu0 0
        %1533 = vmatprep.subr.bf16.mxu0 0
        %1534 = vmatpush1.bf16.xpose.msra.mxu0 0
        %1535 = vmatprep.subr.bf16.mxu0 0
        %1536 = vmatpush1.bf16.xpose.msra.mxu0 0
        %1537 = vmatprep.subr.bf16.mxu0 0
        %1538 = vmatpush1.bf16.xpose.msra.mxu0 0
        %1539 = vmatprep.subr.bf16.mxu0 0
        %1540 = vmatpush1.bf16.xpose.msra.mxu0 0
        %1541 = vmatprep.subr.bf16.mxu0 0
        %1542 = vmatpush1.bf16.xpose.msra.mxu0 0
        %1543 = vmatprep.subr.bf16.mxu0 0
        %1544 = vmatpush1.bf16.xpose.msra.mxu0 0
        %1545 = vmatprep.subr.bf16.mxu0 0
        %1546 = vmatpush1.bf16.xpose.msra.mxu0 0
        %1547 = vmatprep.subr.bf16.mxu0 0
        %1548 = vmatpush1.bf16.xpose.msra.mxu0 0
        %1549 = vmatprep.subr.bf16.mxu0 0
        %1550 = vmatpush1.bf16.xpose.msra.mxu0 0
        %1551 = vmatprep.mubr.bf16.mxu0 0
        %1552 = vmatmul.mubr.bf16.gmra.mrb[0].mxu0 %v1517
        %v1553 = vpop.f32.mrb[0].mxu0
        %v1554 = vadd.f32 0.0, %v1553
        %v1555 = vpop.f32.mrb[0].mxu0
        %v1556 = vpop.f32.mrb[0].mxu0
        %v1557 = vadd.f32 0.0, %v1556
        %v1558 = vpop.f32.mrb[0].mxu0
        %1559 = vdwg.mxu0
        %v1561 = vsel %vm842, %v1337, 0
        %1563 = vmatprep.subr.bf16.mxu0 0
        %1564 = vmatpush1.bf16.xpose.msra.mxu0 %v1561
        %1565 = vmatprep.subr.bf16.mxu0 0
        %1566 = vmatpush1.bf16.xpose.msra.mxu0 0
        %1567 = vmatprep.subr.bf16.mxu0 0
        %1568 = vmatpush1.bf16.xpose.msra.mxu0 0
        %1569 = vmatprep.subr.bf16.mxu0 0
        %1570 = vmatpush1.bf16.xpose.msra.mxu0 0
        %1571 = vmatprep.subr.bf16.mxu0 0
        %1572 = vmatpush1.bf16.xpose.msra.mxu0 0
        %1573 = vmatprep.subr.bf16.mxu0 0
        %1574 = vmatpush1.bf16.xpose.msra.mxu0 0
        %1575 = vmatprep.subr.bf16.mxu0 0
        %1576 = vmatpush1.bf16.xpose.msra.mxu0 0
        %1577 = vmatprep.subr.bf16.mxu0 0
        %1578 = vmatpush1.bf16.xpose.msra.mxu0 0
        %1579 = vmatprep.subr.bf16.mxu0 0
        %1580 = vmatpush1.bf16.xpose.msra.mxu0 0
        %1581 = vmatprep.subr.bf16.mxu0 0
        %1582 = vmatpush1.bf16.xpose.msra.mxu0 0
        %1583 = vmatprep.subr.bf16.mxu0 0
        %1584 = vmatpush1.bf16.xpose.msra.mxu0 0
        %1585 = vmatprep.subr.bf16.mxu0 0
        %1586 = vmatpush1.bf16.xpose.msra.mxu0 0
        %1587 = vmatprep.subr.bf16.mxu0 0
        %1588 = vmatpush1.bf16.xpose.msra.mxu0 0
        %1589 = vmatprep.subr.bf16.mxu0 0
        %1590 = vmatpush1.bf16.xpose.msra.mxu0 0
        %1591 = vmatprep.subr.bf16.mxu0 0
        %1592 = vmatpush1.bf16.xpose.msra.mxu0 0
        %1593 = vmatprep.subr.bf16.mxu0 0
        %1594 = vmatpush1.bf16.xpose.msra.mxu0 0
        %1595 = vmatprep.mubr.bf16.mxu0 0
        %1596 = vmatmul.mubr.bf16.gmra.mrb[0].mxu0 %v1561
        %v1597 = vpop.f32.mrb[0].mxu0
        %v1598 = vadd.f32 0.0, %v1597
        %v1599 = vpop.f32.mrb[0].mxu0
        %v1600 = vpop.f32.mrb[0].mxu0
        %v1601 = vadd.f32 0.0, %v1600
        %v1602 = vpop.f32.mrb[0].mxu0
        %1603 = vdwg.mxu0
        %v1605 = vsel %vm842, %v1338, 0
        %1607 = vmatprep.subr.bf16.mxu0 0
        %1608 = vmatpush1.bf16.xpose.msra.mxu0 %v1605
        %1609 = vmatprep.subr.bf16.mxu0 0
        %1610 = vmatpush1.bf16.xpose.msra.mxu0 0
        %1611 = vmatprep.subr.bf16.mxu0 0
        %1612 = vmatpush1.bf16.xpose.msra.mxu0 0
        %1613 = vmatprep.subr.bf16.mxu0 0
        %1614 = vmatpush1.bf16.xpose.msra.mxu0 0
        %1615 = vmatprep.subr.bf16.mxu0 0
        %1616 = vmatpush1.bf16.xpose.msra.mxu0 0
        %1617 = vmatprep.subr.bf16.mxu0 0
        %1618 = vmatpush1.bf16.xpose.msra.mxu0 0
        %1619 = vmatprep.subr.bf16.mxu0 0
        %1620 = vmatpush1.bf16.xpose.msra.mxu0 0
        %1621 = vmatprep.subr.bf16.mxu0 0
        %1622 = vmatpush1.bf16.xpose.msra.mxu0 0
        %1623 = vmatprep.subr.bf16.mxu0 0
        %1624 = vmatpush1.bf16.xpose.msra.mxu0 0
        %1625 = vmatprep.subr.bf16.mxu0 0
        %1626 = vmatpush1.bf16.xpose.msra.mxu0 0
        %1627 = vmatprep.subr.bf16.mxu0 0
        %1628 = vmatpush1.bf16.xpose.msra.mxu0 0
        %1629 = vmatprep.subr.bf16.mxu0 0
        %1630 = vmatpush1.bf16.xpose.msra.mxu0 0
        %1631 = vmatprep.subr.bf16.mxu0 0
        %1632 = vmatpush1.bf16.xpose.msra.mxu0 0
        %1633 = vmatprep.subr.bf16.mxu0 0
        %1634 = vmatpush1.bf16.xpose.msra.mxu0 0
        %1635 = vmatprep.subr.bf16.mxu0 0
        %1636 = vmatpush1.bf16.xpose.msra.mxu0 0
        %1637 = vmatprep.subr.bf16.mxu0 0
        %1638 = vmatpush1.bf16.xpose.msra.mxu0 0
        %1639 = vmatprep.mubr.bf16.mxu0 0
        %1640 = vmatmul.mubr.bf16.gmra.mrb[0].mxu0 %v1605
        %v1641 = vpop.f32.mrb[0].mxu0
        %v1642 = vadd.f32 0.0, %v1641
        %v1643 = vpop.f32.mrb[0].mxu0
        %v1644 = vpop.f32.mrb[0].mxu0
        %v1645 = vadd.f32 0.0, %v1644
        %v1646 = vpop.f32.mrb[0].mxu0
        %1647 = vdwg.mxu0
        %v1649 = vsel %vm842, %v1339, 0
        %1651 = vmatprep.subr.bf16.mxu0 0
        %1652 = vmatpush1.bf16.xpose.msra.mxu0 %v1649
        %1653 = vmatprep.subr.bf16.mxu0 0
        %1654 = vmatpush1.bf16.xpose.msra.mxu0 0
        %1655 = vmatprep.subr.bf16.mxu0 0
        %1656 = vmatpush1.bf16.xpose.msra.mxu0 0
        %1657 = vmatprep.subr.bf16.mxu0 0
        %1658 = vmatpush1.bf16.xpose.msra.mxu0 0
        %1659 = vmatprep.subr.bf16.mxu0 0
        %1660 = vmatpush1.bf16.xpose.msra.mxu0 0
        %1661 = vmatprep.subr.bf16.mxu0 0
        %1662 = vmatpush1.bf16.xpose.msra.mxu0 0
        %1663 = vmatprep.subr.bf16.mxu0 0
        %1664 = vmatpush1.bf16.xpose.msra.mxu0 0
        %1665 = vmatprep.subr.bf16.mxu0 0
        %1666 = vmatpush1.bf16.xpose.msra.mxu0 0
        %1667 = vmatprep.subr.bf16.mxu0 0
        %1668 = vmatpush1.bf16.xpose.msra.mxu0 0
        %1669 = vmatprep.subr.bf16.mxu0 0
        %1670 = vmatpush1.bf16.xpose.msra.mxu0 0
        %1671 = vmatprep.subr.bf16.mxu0 0
        %1672 = vmatpush1.bf16.xpose.msra.mxu0 0
        %1673 = vmatprep.subr.bf16.mxu0 0
        %1674 = vmatpush1.bf16.xpose.msra.mxu0 0
        %1675 = vmatprep.subr.bf16.mxu0 0
        %1676 = vmatpush1.bf16.xpose.msra.mxu0 0
        %1677 = vmatprep.subr.bf16.mxu0 0
        %1678 = vmatpush1.bf16.xpose.msra.mxu0 0
        %1679 = vmatprep.subr.bf16.mxu0 0
        %1680 = vmatpush1.bf16.xpose.msra.mxu0 0
        %1681 = vmatprep.subr.bf16.mxu0 0
        %1682 = vmatpush1.bf16.xpose.msra.mxu0 0
        %1683 = vmatprep.mubr.bf16.mxu0 0
        %1684 = vmatmul.mubr.bf16.gmra.mrb[0].mxu0 %v1649
        %v1685 = vpop.f32.mrb[0].mxu0
        %v1686 = vadd.f32 0.0, %v1685
        %v1687 = vpop.f32.mrb[0].mxu0
        %v1688 = vpop.f32.mrb[0].mxu0
        %v1689 = vadd.f32 0.0, %v1688
        %v1690 = vpop.f32.mrb[0].mxu0
        %1691 = vdwg.mxu0
        %1692 = vst.msk [vmem:[%s271] sm:$0xff] %vm301, %v1378
        %1693 = vst.msk [vmem:[%s271 + $0x8] sm:$0xff] %vm301, %v1381
        %1694 = vst.msk [vmem:[%s271 + $0x10] sm:$0xff] %vm301, %v1422
        %1695 = vst.msk [vmem:[%s271 + $0x18] sm:$0xff] %vm301, %v1425
        %1696 = vst.msk [vmem:[%s271 + $0x20] sm:$0xff] %vm301, %v1466
        %1697 = vst.msk [vmem:[%s271 + $0x28] sm:$0xff] %vm301, %v1469
        %1698 = vst.msk [vmem:[%s271 + $0x30] sm:$0xff] %vm301, %v1510
        %1699 = vst.msk [vmem:[%s271 + $0x38] sm:$0xff] %vm301, %v1513
        %1700 = vst.msk [vmem:[%s271 + $0x40] sm:$0xff] %vm301, %v1554
        %1701 = vst.msk [vmem:[%s271 + $0x48] sm:$0xff] %vm301, %v1557
        %1702 = vst.msk [vmem:[%s271 + $0x50] sm:$0xff] %vm301, %v1598
        %1703 = vst.msk [vmem:[%s271 + $0x58] sm:$0xff] %vm301, %v1601
        %1704 = vst.msk [vmem:[%s271 + $0x60] sm:$0xff] %vm301, %v1642
        %1705 = vst.msk [vmem:[%s271 + $0x68] sm:$0xff] %vm301, %v1645
        %1706 = vst.msk [vmem:[%s271 + $0x70] sm:$0xff] %vm301, %v1686
        %1707 = vst.msk [vmem:[%s271 + $0x78] sm:$0xff] %vm301, %v1689
        %v1708 = vsel %vm842, %v1316, 0.0
        %v1709 = vsel %vm842, %v1317, 0.0
        %v1710 = vadd.f32 %v1708, %v1709
        %v1711 = vrot.slane %v1710, 4
        %v1712 = vadd.f32 %v1710, %v1711
        %v1713 = vrot.slane %v1712, 2
        %v1714 = vadd.f32 %v1712, %v1713
        %v1715 = vrot.slane %v1714, 1
        %v1716 = vadd.f32 %v1714, %v1715
        %v1717 = vsel %vm842, %v1318, 0.0
        %v1718 = vsel %vm842, %v1319, 0.0
        %v1719 = vadd.f32 %v1717, %v1718
        %v1720 = vrot.slane %v1719, 4
        %v1721 = vadd.f32 %v1719, %v1720
        %v1722 = vrot.slane %v1721, 2
        %v1723 = vadd.f32 %v1721, %v1722
        %v1724 = vrot.slane %v1723, 1
        %v1725 = vadd.f32 %v1723, %v1724
        %v1726 = vsel %vm842, %v1320, 0.0
        %v1727 = vsel %vm842, %v1321, 0.0
        %v1728 = vadd.f32 %v1726, %v1727
        %v1729 = vrot.slane %v1728, 4
        %v1730 = vadd.f32 %v1728, %v1729
        %v1731 = vrot.slane %v1730, 2
        %v1732 = vadd.f32 %v1730, %v1731
        %v1733 = vrot.slane %v1732, 1
        %v1734 = vadd.f32 %v1732, %v1733
        %v1735 = vsel %vm842, %v1322, 0.0
        %v1736 = vsel %vm842, %v1323, 0.0
        %v1737 = vadd.f32 %v1735, %v1736
        %v1738 = vrot.slane %v1737, 4
        %v1739 = vadd.f32 %v1737, %v1738
        %v1740 = vrot.slane %v1739, 2
        %v1741 = vadd.f32 %v1739, %v1740
        %v1742 = vrot.slane %v1741, 1
        %v1743 = vadd.f32 %v1741, %v1742
        %v1744 = vsel %vm842, %v1324, 0.0
        %v1745 = vsel %vm842, %v1325, 0.0
        %v1746 = vadd.f32 %v1744, %v1745
        %v1747 = vrot.slane %v1746, 4
        %v1748 = vadd.f32 %v1746, %v1747
        %v1749 = vrot.slane %v1748, 2
        %v1750 = vadd.f32 %v1748, %v1749
        %v1751 = vrot.slane %v1750, 1
        %v1752 = vadd.f32 %v1750, %v1751
        %v1753 = vsel %vm842, %v1326, 0.0
        %v1754 = vsel %vm842, %v1327, 0.0
        %v1755 = vadd.f32 %v1753, %v1754
        %v1756 = vrot.slane %v1755, 4
        %v1757 = vadd.f32 %v1755, %v1756
        %v1758 = vrot.slane %v1757, 2
        %v1759 = vadd.f32 %v1757, %v1758
        %v1760 = vrot.slane %v1759, 1
        %v1761 = vadd.f32 %v1759, %v1760
        %v1762 = vsel %vm842, %v1328, 0.0
        %v1763 = vsel %vm842, %v1329, 0.0
        %v1764 = vadd.f32 %v1762, %v1763
        %v1765 = vrot.slane %v1764, 4
        %v1766 = vadd.f32 %v1764, %v1765
        %v1767 = vrot.slane %v1766, 2
        %v1768 = vadd.f32 %v1766, %v1767
        %v1769 = vrot.slane %v1768, 1
        %v1770 = vadd.f32 %v1768, %v1769
        %v1771 = vsel %vm842, %v1330, 0.0
        %v1772 = vsel %vm842, %v1331, 0.0
        %v1773 = vadd.f32 %v1771, %v1772
        %v1774 = vrot.slane %v1773, 4
        %v1775 = vadd.f32 %v1773, %v1774
        %v1776 = vrot.slane %v1775, 2
        %v1777 = vadd.f32 %v1775, %v1776
        %v1778 = vrot.slane %v1777, 1
        %v1779 = vadd.f32 %v1777, %v1778
        %v1780 = vrcp.pop 16.0
        %v1781 = vmul.f32 %v1716, %v1780
        %v1782 = vmul.f32 %v1725, %v1780
        %v1783 = vmul.f32 %v1734, %v1780
        %v1784 = vmul.f32 %v1743, %v1780
        %v1785 = vmul.f32 %v1752, %v1780
        %v1786 = vmul.f32 %v1761, %v1780
        %v1787 = vmul.f32 %v1770, %v1780
        %v1788 = vmul.f32 %v1779, %v1780
        %v1789 = vpack.c.bf16 %v1781, %v1781
        %v1790 = vpack.c.bf16 %v1782, %v1782
        %v1791 = vpack.c.bf16 %v1783, %v1783
        %v1792 = vpack.c.bf16 %v1784, %v1784
        %v1793 = vpack.c.bf16 %v1785, %v1785
        %v1794 = vpack.c.bf16 %v1786, %v1786
        %v1795 = vpack.c.bf16 %v1787, %v1787
        %v1796 = vpack.c.bf16 %v1788, %v1788
        %v1797 = vld [vmem:[%s3] sm:$0xf]
        %v1798 = vld [vmem:[%s3 + $0x4] sm:$0xf]
        %v1799 = vld [vmem:[%s3 + $0x8] sm:$0xf]
        %v1800 = vld [vmem:[%s3 + $0xc] sm:$0xf]
        %v1801 = vld [vmem:[%s4] sm:$0x1]
        %v1803 = vlaneseq
        %v1804 = vshrl.u32 %v1803, 7
        %v1805 = vsub.s32 0, %v1804
        %v1806 = vrot.slane %v1801, %v1805
        %v1816 = vunpack.c.l.b16 %v1789
        %v1817 = vunpack.c.l.b16 %v1790
        %v1818 = vunpack.c.l.b16 %v1791
        %v1819 = vunpack.c.l.b16 %v1792
        %v1820 = vunpack.c.l.b16 %v1793
        %v1821 = vunpack.c.l.b16 %v1794
        %v1822 = vunpack.c.l.b16 %v1795
        %v1823 = vunpack.c.l.b16 %v1796
        %vm1824 = vcmask 1041409
        %v1825 = vsel %vm1824, %v1817, %v1816
        %vm1826 = vcmask 1042434
        %v1827 = vsel %vm1826, %v1818, %v1825
        %vm1828 = vcmask 1043459
        %v1829 = vsel %vm1828, %v1819, %v1827
        %vm1830 = vcmask 1044484
        %v1831 = vsel %vm1830, %v1820, %v1829
        %vm1832 = vcmask 1045509
        %v1833 = vsel %vm1832, %v1821, %v1831
        %vm1834 = vcmask 1046534
        %v1835 = vsel %vm1834, %v1822, %v1833
        %vm1836 = vcmask 1047559
        %v1837 = vsel %vm1836, %v1823, %v1835
        %v1838 = vpack.c.b16 %v1837, %v1837
        %v1843 = vunpack.c.l.b16 %v1797
        %v1844 = vunpack.c.l.b16 %v1798
        %v1845 = vunpack.c.l.b16 %v1799
        %v1846 = vunpack.c.l.b16 %v1800
        %v1847 = vpack.c.b16 %v1844, %v1843
        %v1848 = vpack.c.b16 %v1846, %v1845
        %v1852 = vsel %vm842, %v1838, 0
        %1854 = vmatprep.subr.bf16.mxu0 0
        %1855 = vmatpush1.bf16.msra.mxu0 %v1847
        %1856 = vmatprep.subr.bf16.mxu0 0
        %1857 = vmatpush1.bf16.msra.mxu0 %v1848
        %1858 = vmatprep.subr.bf16.mxu0 0
        %1859 = vmatpush1.bf16.msra.mxu0 0
        %1860 = vmatprep.subr.bf16.mxu0 0
        %1861 = vmatpush1.bf16.msra.mxu0 0
        %1862 = vmatprep.subr.bf16.mxu0 0
        %1863 = vmatpush1.bf16.msra.mxu0 0
        %1864 = vmatprep.subr.bf16.mxu0 0
        %1865 = vmatpush1.bf16.msra.mxu0 0
        %1866 = vmatprep.subr.bf16.mxu0 0
        %1867 = vmatpush1.bf16.msra.mxu0 0
        %1868 = vmatprep.subr.bf16.mxu0 0
        %1869 = vmatpush1.bf16.msra.mxu0 0
        %1870 = vmatprep.subr.bf16.mxu0 0
        %1871 = vmatpush1.bf16.msra.mxu0 0
        %1872 = vmatprep.subr.bf16.mxu0 0
        %1873 = vmatpush1.bf16.msra.mxu0 0
        %1874 = vmatprep.subr.bf16.mxu0 0
        %1875 = vmatpush1.bf16.msra.mxu0 0
        %1876 = vmatprep.subr.bf16.mxu0 0
        %1877 = vmatpush1.bf16.msra.mxu0 0
        %1878 = vmatprep.subr.bf16.mxu0 0
        %1879 = vmatpush1.bf16.msra.mxu0 0
        %1880 = vmatprep.subr.bf16.mxu0 0
        %1881 = vmatpush1.bf16.msra.mxu0 0
        %1882 = vmatprep.subr.bf16.mxu0 0
        %1883 = vmatpush1.bf16.msra.mxu0 0
        %1884 = vmatprep.subr.bf16.mxu0 0
        %1885 = vmatpush1.bf16.msra.mxu0 0
        %1886 = vmatprep.mubr.bf16.mxu0 0
        %1887 = vmatmul.mubr.bf16.gmra.mrb[0].mxu0 %v1852
        %v1888 = vpop.f32.mrb[0].mxu0
        %v1889 = vadd.f32 %v1806, %v1888
        %v1890 = vpop.f32.mrb[0].mxu0
        %v1891 = vpop.f32.mrb[0].mxu0
        %v1892 = vpop.f32.mrb[0].mxu0
        %1893 = vdwg.mxu0
        %v1894 = vlaneseq
        %v1895 = vand.u32 %v1894, 127
        %vm1896 = vcmp.lt.s32.totalorder %v1895, 4
        %v1897 = vxor.u32 %v1889, 2147483648
        %v1898 = vmul.f32 %v1897, 1.442695
        %v1899 = vpow.pop %v1898
        %v1900 = vadd.f32 %v1899, 1.0
        %v1901 = vrcp.pop %v1900
        %v1902 = vmul.f32 1.0, %v1901
        %v1903 = vsel %vm1896, %v1902, %v1889
        %vm1904 = vcmask 56320
        %1905 = vst.msk [vmem:[%s283] sm:$0xff] %vm1904, %v1903
        %s1906 = sand.u32 %s142, 1
        %s1907 = scalar_lea.sflag [#allocation4], %s1906
        %s1908 = sand.u32 %s142, 1
        %s1909 = smul.addr %s1908, 128
        %s1910 = scalar_lea.vmem [#allocation5], %s1909
        %p1911 = scmp.lt.s32.totalorder %s24, 1
        %s1912 = scalar_select %p1911, %s24, 1
        %s1913 = smul.addr %s1912, 8
        %s1914 = scalar_lea.vmem %s6, %s1913
        // Predicated region
        $region45: #{discriminator_gcn_fc_sc_forward.1} parent=39 // pred_check
          %p1915 = pneg %p152
        $region46: #{discriminator_gcn_fc_sc_forward.1} parent=39 // pred_check_branch
          %1917 = sbr.rel (%p1915) target = $region48
        $region47: #{discriminator_gcn_fc_sc_forward.1} parent=39 // pred_region
          %s1918 = smul.u32 8, %s24
          %s1920 = ssub.s32 2048, 2048
          %1921 = vsyncadd %s1907, %s1920
          %s1922 = smul.addr %s1918, 2
          %s1923 = smul.addr %s1922, 128
          %s1924 = scalar_lea.hbm %s5, %s1923
          %s1925 = sshll.u32 %s1910, 4
          %s1926 = int_to_ptr.vmem [resolvable:$true] %s1925
          %1931 = dma.vmem_to_hbm [thread:$0]  %s1926, 2048, %s1924, %s1907, 128, 128, 8
        $region48: #{discriminator_gcn_fc_sc_forward.1} parent=39 // pred_fallthru
          _
        // Predicated region
        $region49: #{discriminator_gcn_fc_sc_forward.1} parent=39 // pred_check
          %p1932 = pneg %p178
        $region50: #{discriminator_gcn_fc_sc_forward.1} parent=39 // pred_check_branch
          %1934 = sbr.rel (%p1932) target = $region52
        $region51: #{discriminator_gcn_fc_sc_forward.1} parent=39 // pred_region
          _
        $region52: #{discriminator_gcn_fc_sc_forward.1} parent=39 // pred_fallthru
          _
      $region40: #{discriminator_gcn_fc_sc_forward.1} parent=5 // pred_fallthru
        _
      %p1935 = scmp.le.s32.totalorder 2, %s19
      // Predicated region
      $region53: #{discriminator_gcn_fc_sc_forward.1} parent=5 // pred_check
        %p1936 = pneg %p1935
      $region54: #{discriminator_gcn_fc_sc_forward.1} parent=5 // pred_check_branch
        %1938 = sbr.rel (%p1936) target = $region56
      $region55: #{discriminator_gcn_fc_sc_forward.1} parent=5 // pred_region
        %s1939 = ssub.s32 %s19, 2
        // Predicated region
        $region57: #{discriminator_gcn_fc_sc_forward.1} parent=55 // pred_check
          %p1940 = pneg %p158
        $region58: #{discriminator_gcn_fc_sc_forward.1} parent=55 // pred_check_branch
          %1942 = sbr.rel (%p1940) target = $region60
        $region59: #{discriminator_gcn_fc_sc_forward.1} parent=55 // pred_region
          %s1943 = sand.u32 %s143, 1
          %s1944 = scalar_lea.sflag [#allocation4], %s1943
          %s1945 = sand.u32 %s143, 1
          %s1946 = smul.addr %s1945, 128
          %s1947 = scalar_lea.vmem [#allocation5], %s1946
          %1948 = dma.done %s1944, 2048
        $region60: #{discriminator_gcn_fc_sc_forward.1} parent=55 // pred_fallthru
          _
        // Predicated region
        $region61: #{discriminator_gcn_fc_sc_forward.1} parent=55 // pred_check
          %p1949 = pneg %p184
        $region62: #{discriminator_gcn_fc_sc_forward.1} parent=55 // pred_check_branch
          %1951 = sbr.rel (%p1949) target = $region64
        $region63: #{discriminator_gcn_fc_sc_forward.1} parent=55 // pred_region
          %p1952 = scmp.lt.s32.totalorder %s25, 1
          %s1953 = scalar_select %p1952, %s25, 1
          %s1954 = smul.addr %s1953, 8
          %s1955 = scalar_lea.vmem %s6, %s1954
        $region64: #{discriminator_gcn_fc_sc_forward.1} parent=55 // pred_fallthru
          _
      $region56: #{discriminator_gcn_fc_sc_forward.1} parent=5 // pred_fallthru
        _
    $region6: #{discriminator_gcn_fc_sc_forward.1} parent=1 // loop_footer
      %s23 = sadd.s32 1, %s19
    $region7: #{discriminator_gcn_fc_sc_forward.1} parent=1 // loop_footer_branch
      %18 = sbr.rel target = $region3
    $region8: #{discriminator_gcn_fc_sc_forward.1} parent=1 // loop_exit
      _
    %1956 = vsyncpa [#allocation3], 1
    %s1957 = scalar_lea.sflag [#allocation3], 1
    %1958 = vsyncpa %s1957, 1
    %1959 = vsyncpa [#allocation4], 1
    %s1960 = scalar_lea.sflag [#allocation4], 1
    %1961 = vsyncpa %s1960, 1

</llo_original>
